<compile_context>
chip_gen: v5e
topology: v5e:2x2
jax: 0.10.0
libtpu: 0.0.40
codegen_flags: <defaults>
</compile_context>

<pallas_src>
import jax
import jax.numpy as jnp
from jax import lax
from jax.experimental import pallas as pl
from jax.experimental.pallas import tpu as pltpu

BN_EPS = 1e-5
LANE = 128
SUBLANE = 8
BF16_PACK = 16  # bf16 second-minor packing


def _round_up(x, m):
    return ((x + m - 1) // m) * m


def _phase2_tile(m_pad, tm, cap=2048):
    # Tallest divisor of m_pad (multiple of tm) not exceeding `cap` rows:
    # tall streaming tiles reach ~85% of HBM roofline vs ~29% at 128 rows.
    n1 = m_pad // tm
    best = 1
    for d in range(1, n1 + 1):
        if n1 % d == 0 and tm * d <= cap:
            best = d
    return tm * best


def im2col_bf16(x, kh, kw, stride=1, padding=0):
    """x: [N, Cin, H, W] -> bf16 patches [N*Ho*Wo, Cin*kh*kw]."""
    x = x.astype(jnp.bfloat16)  # cast BEFORE im2col: halves the Kh*Kw-amplified traffic
    n, c, h, w = x.shape
    if padding:
        x = jnp.pad(x, ((0, 0), (0, 0), (padding, padding), (padding, padding)))
        h += 2 * padding
        w += 2 * padding
    ho = (h - kh) // stride + 1
    wo = (w - kw) // stride + 1
    cols = []
    for i in range(kh):
        for j in range(kw):
            cols.append(x[:, :, i:i + (ho - 1) * stride + 1:stride,
                           j:j + (wo - 1) * stride + 1:stride])
    p = jnp.stack(cols, axis=0).reshape(kh, kw, n, c, ho, wo)
    p = p.transpose(2, 4, 5, 3, 0, 1)             # [N, Ho, Wo, C, kh, kw]
    return p.reshape(n * ho * wo, c * kh * kw), (n, ho, wo)


# --------------------------------------------------------------------------
# Fused fast path: conv + BN stats + BN affine + SiLU in a single pallas_call.
# Grid = (phase, tile):  phase 0 -> matmul into VMEM scratch + accumulate
# per-channel sum/sumsq; phase 1 -> fold stats into scale/shift (once) and
# apply affine + SiLU from the scratch.  Used when the conv output fits VMEM.
# --------------------------------------------------------------------------
def _make_fused_kernel(tm, inv_m):
    def kernel(p_ref, w_ref, g_ref, b_ref, out_ref,
               y_sc, sum_sc, sq_sc, scale_sc, shift_sc):
        phase = pl.program_id(0)
        i = pl.program_id(1)
        row = pl.multiple_of(i * tm, tm)

        @pl.when(jnp.logical_and(phase == 0, i == 0))
        def _():
            sum_sc[...] = jnp.zeros_like(sum_sc)
            sq_sc[...] = jnp.zeros_like(sq_sc)

        @pl.when(phase == 0)
        def _():
            y = jnp.dot(p_ref[...], w_ref[...], preferred_element_type=jnp.float32)
            y_sc[pl.ds(row, tm), :] = y
            # One-pass stats from the f32 accumulator (padded rows are 0).
            sum_sc[...] += jnp.sum(y, axis=0, keepdims=True)
            sq_sc[...] += jnp.sum(y * y, axis=0, keepdims=True)

        @pl.when(jnp.logical_and(phase == 1, i == 0))
        def _():
            mean = sum_sc[...] * inv_m
            # TODO(synk): E[x^2]-E[x]^2 can cancel for large-mean activations;
            # switch to shifted sums if such distributions are expected.
            var = sq_sc[...] * inv_m - mean * mean
            inv_std = lax.rsqrt(var + BN_EPS)
            scale_sc[...] = g_ref[...] * inv_std
            shift_sc[...] = b_ref[...] - mean * g_ref[...] * inv_std

        @pl.when(phase == 1)
        def _():
            z = y_sc[pl.ds(row, tm), :] * scale_sc[...] + shift_sc[...]
            out_ref[...] = (z * jax.nn.sigmoid(z)).astype(out_ref.dtype)

    return kernel


def _conv_bn_act_fused(patches_p, w_p, gamma_p, beta_p, m, tm):
    m_pad, k_pad = patches_p.shape
    c_pad = w_p.shape[1]
    n_tiles = m_pad // tm

    cost = pl.CostEstimate(
        flops=2 * m_pad * k_pad * c_pad + 8 * m_pad * c_pad,
        transcendentals=m_pad * c_pad,
        bytes_accessed=(m_pad * k_pad * 2 + k_pad * c_pad * 2 + m_pad * c_pad * 4))

    out = pl.pallas_call(
        _make_fused_kernel(tm, 1.0 / m),
        out_shape=jax.ShapeDtypeStruct((m_pad, c_pad), jnp.float32),
        grid_spec=pltpu.PrefetchScalarGridSpec(
            num_scalar_prefetch=0,
            grid=(2, n_tiles),
            in_specs=[
                # patches: tile i in phase 0, pinned to tile 0 in phase 1 (no re-stream)
                pl.BlockSpec((tm, k_pad), lambda p, i: ((1 - p) * i, 0)),
                pl.BlockSpec((k_pad, c_pad), lambda p, i: (0, 0)),   # weight resident
                pl.BlockSpec((1, c_pad), lambda p, i: (0, 0)),       # gamma
                pl.BlockSpec((1, c_pad), lambda p, i: (0, 0)),       # beta
            ],
            # Output block pinned to 0 during phase 0 (never written/flushed),
            # walks the tiles during phase 1.
            out_specs=pl.BlockSpec((tm, c_pad), lambda p, i: (p * i, 0)),
            scratch_shapes=[
                pltpu.VMEM((m_pad, c_pad), jnp.float32),   # full conv output stays on-chip
                pltpu.VMEM((1, c_pad), jnp.float32),       # sum
                pltpu.VMEM((1, c_pad), jnp.float32),       # sum of squares
                pltpu.VMEM((1, c_pad), jnp.float32),       # folded scale
                pltpu.VMEM((1, c_pad), jnp.float32),       # folded shift
            ]),
        compiler_params=pltpu.CompilerParams(
            dimension_semantics=("arbitrary", "arbitrary")),
        cost_estimate=cost,
    )(patches_p, w_p, gamma_p.reshape(1, c_pad), beta_p.reshape(1, c_pad))
    return out


# --------------------------------------------------------------------------
# Two-phase path for large layers (conv output does not fit VMEM).
# --------------------------------------------------------------------------
def conv_stats_kernel(p_ref, w_ref, y_ref, sum_ref, sq_ref):
    # p: [TM, Kp] bf16, w: [Kp, Cp] bf16 (resident), y: [TM, Cp] bf16,
    # sum/sq: [8, Cp] f32 per-tile partials (from the f32 accumulator).
    y = jnp.dot(p_ref[...], w_ref[...], preferred_element_type=jnp.float32)
    y_ref[...] = y.astype(y_ref.dtype)            # bf16 intermediate: halves y traffic
    s1 = jnp.sum(y, axis=0, keepdims=True)
    s2 = jnp.sum(y * y, axis=0, keepdims=True)
    sum_ref[...] = jnp.broadcast_to(s1, sum_ref.shape)
    sq_ref[...] = jnp.broadcast_to(s2, sq_ref.shape)


def bn_silu_kernel(y_ref, scale_ref, shift_ref, out_ref):
    # Folded BN affine + SiLU; math in f32 (v5e has no bf16 VPU/EUP).
    z = y_ref[...].astype(jnp.float32) * scale_ref[...] + shift_ref[...]
    out_ref[...] = (z * jax.nn.sigmoid(z)).astype(out_ref.dtype)


def _conv_bn_act_two_phase(patches_p, w_p, gamma_p, beta_p, m, tm):
    m_pad, k_pad = patches_p.shape
    c_pad = w_p.shape[1]
    n_tiles = m_pad // tm

    # ---- Phase 1: conv-as-matmul + per-tile per-channel (sum, sumsq) ----
    cost1 = pl.CostEstimate(
        flops=2 * m_pad * k_pad * c_pad,
        transcendentals=0,
        bytes_accessed=(m_pad * k_pad * 2 + k_pad * c_pad * 2
                        + m_pad * c_pad * 2 + 2 * n_tiles * SUBLANE * c_pad * 4))
    y, psum, psq = pl.pallas_call(
        conv_stats_kernel,
        out_shape=(
            jax.ShapeDtypeStruct((m_pad, c_pad), jnp.bfloat16),
            jax.ShapeDtypeStruct((n_tiles * SUBLANE, c_pad), jnp.float32),
            jax.ShapeDtypeStruct((n_tiles * SUBLANE, c_pad), jnp.float32),
        ),
        grid_spec=pltpu.PrefetchScalarGridSpec(
            num_scalar_prefetch=0,
            grid=(n_tiles,),
            in_specs=[
                pl.BlockSpec((tm, k_pad), lambda i: (i, 0)),
                # TODO(synk): for very large weights on v7x (64 MiB VMEM), add a
                # Cout grid axis or single-buffer this resident weight.
                pl.BlockSpec((k_pad, c_pad), lambda i: (0, 0)),
            ],
            out_specs=[
                pl.BlockSpec((tm, c_pad), lambda i: (i, 0)),
                pl.BlockSpec((SUBLANE, c_pad), lambda i: (i, 0)),
                pl.BlockSpec((SUBLANE, c_pad), lambda i: (i, 0)),
            ]),
        compiler_params=pltpu.CompilerParams(dimension_semantics=("parallel",)),
        cost_estimate=cost1,
    )(patches_p, w_p)

    # ---- Tiny per-channel combine (exact whole-batch stats; padded rows are 0) ----
    total_sum = psum.reshape(n_tiles, SUBLANE, c_pad)[:, 0, :].sum(axis=0)
    total_sq = psq.reshape(n_tiles, SUBLANE, c_pad)[:, 0, :].sum(axis=0)
    mean = total_sum / m
    var = total_sq / m - mean * mean              # biased variance (BN training fwd)
    inv_std = lax.rsqrt(var + BN_EPS)
    scale = (gamma_p * inv_std).reshape(1, c_pad)
    shift = (beta_p - mean * gamma_p * inv_std).reshape(1, c_pad)

    # ---- Phase 2: folded BN affine + SiLU with tall streaming tiles ----
    tm2 = _phase2_tile(m_pad, tm)
    n_tiles2 = m_pad // tm2
    cost2 = pl.CostEstimate(
        flops=4 * m_pad * c_pad,
        transcendentals=m_pad * c_pad,
        bytes_accessed=m_pad * c_pad * (2 + 4) + 2 * c_pad * 4)
    out = pl.pallas_call(
        bn_silu_kernel,
        out_shape=jax.ShapeDtypeStruct((m_pad, c_pad), jnp.float32),
        grid_spec=pltpu.PrefetchScalarGridSpec(
            num_scalar_prefetch=0,
            grid=(n_tiles2,),
            in_specs=[
                pl.BlockSpec((tm2, c_pad), lambda i: (i, 0)),
                pl.BlockSpec((1, c_pad), lambda i: (0, 0)),
                pl.BlockSpec((1, c_pad), lambda i: (0, 0)),
            ],
            out_specs=pl.BlockSpec((tm2, c_pad), lambda i: (i, 0))),
        compiler_params=pltpu.CompilerParams(dimension_semantics=("parallel",)),
        cost_estimate=cost2,
    )(y, scale, shift)
    return out


# --------------------------------------------------------------------------
# Wrapper
# --------------------------------------------------------------------------
def conv_bn_act(x, weight, gamma, beta, *, stride=1, padding=0, tm=256,
                fuse=None, fuse_vmem_bytes=8 << 20):
    """x: [N,Cin,H,W]; weight: [Cout,Cin,Kh,Kw] (OIHW); gamma/beta: [Cout]."""
    cout, cin, kh, kw = weight.shape
    patches, (n, ho, wo) = im2col_bf16(x, kh, kw, stride, padding)
    m, k = patches.shape

    k_pad = _round_up(k, BF16_PACK)     # no 128-lane K padding: saves HBM bytes & MXU flops
    c_pad = _round_up(cout, LANE)       # lane-dense output (unmasked vst)
    m_pad = _round_up(m, tm)

    patches_p = jnp.pad(patches, ((0, m_pad - m), (0, k_pad - k)))
    w2d = weight.reshape(cout, cin * kh * kw).T.astype(jnp.bfloat16)
    w_p = jnp.pad(w2d, ((0, k_pad - k), (0, c_pad - cout)))
    gamma_p = jnp.pad(gamma.astype(jnp.float32), (0, c_pad - cout))
    beta_p = jnp.pad(beta.astype(jnp.float32), (0, c_pad - cout))

    if fuse is None:
        fuse = (m_pad * c_pad * 4) <= fuse_vmem_bytes   # conv output fits in a VMEM scratch

    if fuse:
        out = _conv_bn_act_fused(patches_p, w_p, gamma_p, beta_p, m, tm)
    else:
        out = _conv_bn_act_two_phase(patches_p, w_p, gamma_p, beta_p, m, tm)

    # [M, Cout] (un-pad) -> [N, Ho, Wo, Cout] -> NCHW (module output layout).
    return out[:m, :cout].reshape(n, ho, wo, cout).transpose(0, 3, 1, 2)


def reference(x, weight, gamma, beta, dtype=jnp.float32):
    y = lax.conv_general_dilated(
        x.astype(dtype), weight.astype(dtype), (1, 1), "VALID",
        dimension_numbers=("NCHW", "OIHW", "NCHW"),
        preferred_element_type=jnp.float32)
    mean = y.mean(axis=(0, 2, 3), keepdims=True)
    var = y.var(axis=(0, 2, 3), keepdims=True)    # biased, matches BN training fwd
    z = (y - mean) / jnp.sqrt(var + BN_EPS)
    z = z * gamma.reshape(1, -1, 1, 1) + beta.reshape(1, -1, 1, 1)
    return z * jax.nn.sigmoid(z)


if __name__ == "__main__":
    # ConvBnAct(n_in=4, n_out=8, kernel_size=3, stride=1, padding=0, bn=True, act=True, bias=False)
    key = jax.random.PRNGKey(0)
    kx, kwt, kg, kb = jax.random.split(key, 4)

    N, CIN, H, W = 2, 4, 16, 16
    COUT, KH, KW = 8, 3, 3

    x = jax.random.normal(kx, (N, CIN, H, W), dtype=jnp.float32)
    weight = jax.random.normal(kwt, (COUT, CIN, KH, KW), dtype=jnp.float32) * 0.1
    gamma = 1.0 + 0.1 * jax.random.normal(kg, (COUT,), dtype=jnp.float32)
    beta = 0.1 * jax.random.normal(kb, (COUT,), dtype=jnp.float32)

    # Fused single-kernel fast path (default for this small layer).
    out = jax.block_until_ready(conv_bn_act(x, weight, gamma, beta))
    assert out.shape == (N, COUT, H - KH + 1, W - KW + 1), out.shape

    ref_bf16 = jax.block_until_ready(reference(x, weight, gamma, beta, dtype=jnp.bfloat16))
    ref_f32 = jax.block_until_ready(reference(x, weight, gamma, beta, dtype=jnp.float32))

    # Tight check vs a reference using the same matmul precision (bf16 in, f32 acc).
    err_bf16 = float(jnp.max(jnp.abs(out - ref_bf16)))
    assert jnp.allclose(out, ref_bf16, atol=1e-3, rtol=1e-3), err_bf16
    # Loose sanity check vs the pure-f32 module semantics (bf16 MXU rounding only).
    err_f32 = float(jnp.max(jnp.abs(out - ref_f32)))
    assert jnp.allclose(out, ref_f32, atol=5e-2, rtol=5e-2), err_f32

    # Exercise the two-phase (large-layer) path too; it carries y in bf16
    # between kernels, so allow bf16-level deviation from the fused result.
    out2 = jax.block_until_ready(conv_bn_act(x, weight, gamma, beta, fuse=False))
    err_2p = float(jnp.max(jnp.abs(out2 - ref_f32)))
    assert jnp.allclose(out2, ref_f32, atol=5e-2, rtol=5e-2), err_2p
    err_paths = float(jnp.max(jnp.abs(out2 - out)))
    assert jnp.allclose(out2, out, atol=3e-2, rtol=3e-2), err_paths

    print("KERNEL_OK")
</pallas_src>

<mosaic_0001>
module attributes {stable_mosaic.version = 11 : i64} {
  func.func @kernel(%arg0: i32, %arg1: i32, %arg2: memref<256x48xbf16, #tpu.memory_space<vmem>>, %arg3: memref<48x128xbf16, #tpu.memory_space<vmem>>, %arg4: memref<1x128xf32, #tpu.memory_space<vmem>>, %arg5: memref<1x128xf32, #tpu.memory_space<vmem>>, %arg6: memref<256x128xf32, #tpu.memory_space<vmem>>, %arg7: memref<512x128xf32, #tpu.memory_space<vmem>>, %arg8: memref<1x128xf32, #tpu.memory_space<vmem>>, %arg9: memref<1x128xf32, #tpu.memory_space<vmem>>, %arg10: memref<1x128xf32, #tpu.memory_space<vmem>>, %arg11: memref<1x128xf32, #tpu.memory_space<vmem>>) attributes {dimension_semantics = [#tpu.dimension_semantics<arbitrary>, #tpu.dimension_semantics<arbitrary>], iteration_bounds = array<i64: 2, 2>, scalar_prefetch = 0 : i64, scratch_operands = 5 : i64, tpu.core_type = #tpu.core_type<tc>, window_params = [{transform_indices = @transform_0, window_bounds = array<i64: 256, 48>}, {pipeline_mode = #tpu.pipeline_mode<synchronous>, transform_indices = @transform_1, window_bounds = array<i64: 48, 128>}, {pipeline_mode = #tpu.pipeline_mode<synchronous>, transform_indices = @transform_2, window_bounds = array<i64: 1, 128>}, {pipeline_mode = #tpu.pipeline_mode<synchronous>, transform_indices = @transform_3, window_bounds = array<i64: 1, 128>}, {transform_indices = @transform_4, window_bounds = array<i64: 256, 128>}]} {
    %c256_i32 = arith.constant 256 : i32
    %0 = arith.muli %arg1, %c256_i32 : i32
    %1 = tpu.assume_multiple %0, 256 : i32
    %c0_i32 = arith.constant 0 : i32
    %2 = arith.cmpi eq, %arg0, %c0_i32 : i32
    %c0_i32_0 = arith.constant 0 : i32
    %3 = arith.cmpi eq, %arg1, %c0_i32_0 : i32
    %4 = arith.andi %2, %3 : i1
    %5 = arith.extui %4 : i1 to i32
    %c0_i32_1 = arith.constant 0 : i32
    %6 = arith.cmpi ne, %5, %c0_i32_1 : i32
    scf.if %6 {
      %cst = arith.constant 0.000000e+00 : f32
      %18 = vector.broadcast %cst : f32 to vector<1x128xf32>
      %c0 = arith.constant 0 : index
      %c0_8 = arith.constant 0 : index
      %19 = vector.load %arg8[%c0, %c0_8] : memref<1x128xf32, #tpu.memory_space<vmem>>, vector<1x128xf32>
      tpu.vector_store %arg8[%c0, %c0_8], %18 {strides = array<i32>} : memref<1x128xf32, #tpu.memory_space<vmem>>, vector<1x128xf32>,
      %cst_9 = arith.constant 0.000000e+00 : f32
      %20 = vector.broadcast %cst_9 : f32 to vector<1x128xf32>
      %c0_10 = arith.constant 0 : index
      %c0_11 = arith.constant 0 : index
      %21 = vector.load %arg9[%c0_10, %c0_11] : memref<1x128xf32, #tpu.memory_space<vmem>>, vector<1x128xf32>
      tpu.vector_store %arg9[%c0_10, %c0_11], %20 {strides = array<i32>} : memref<1x128xf32, #tpu.memory_space<vmem>>, vector<1x128xf32>,
    } else {
    }
    %c0_i32_2 = arith.constant 0 : i32
    %7 = arith.cmpi eq, %arg0, %c0_i32_2 : i32
    %8 = arith.extui %7 : i1 to i32
    %c0_i32_3 = arith.constant 0 : i32
    %9 = arith.cmpi ne, %8, %c0_i32_3 : i32
    scf.if %9 {
      %c0 = arith.constant 0 : index
      %c0_8 = arith.constant 0 : index
      %18 = vector.load %arg2[%c0, %c0_8] : memref<256x48xbf16, #tpu.memory_space<vmem>>, vector<256x48xbf16>
      %c0_9 = arith.constant 0 : index
      %c0_10 = arith.constant 0 : index
      %19 = vector.load %arg3[%c0_9, %c0_10] : memref<48x128xbf16, #tpu.memory_space<vmem>>, vector<48x128xbf16>
      %cst = arith.constant dense<0.000000e+00> : vector<256x128xf32>
      %20 = tpu.matmul %18, %19, %cst {dimension_numbers = #tpu.dot_dimension_numbers<[1], [0], [0], [1], [0, 0, 1, 1], [], []>} : vector<256x48xbf16>, vector<48x128xbf16>, vector<256x128xf32> -> vector<256x128xf32>
      %21 = arith.index_cast %1 : i32 to index
      %c0_11 = arith.constant 0 : index
      %22 = vector.load %arg7[%21, %c0_11] : memref<512x128xf32, #tpu.memory_space<vmem>>, vector<256x128xf32>
      tpu.vector_store %arg7[%21, %c0_11], %20 {strides = array<i32>} : memref<512x128xf32, #tpu.memory_space<vmem>>, vector<256x128xf32>,
      %c0_12 = arith.constant 0 : index
      %c0_13 = arith.constant 0 : index
      %23 = vector.load %arg8[%c0_12, %c0_13] : memref<1x128xf32, #tpu.memory_space<vmem>>, vector<1x128xf32>
      %cst_14 = arith.constant dense<0.000000e+00> : vector<128xf32>
      %24 = vector.multi_reduction <add>, %20, %cst_14 [0] : vector<256x128xf32> to vector<128xf32>
      %25 = vector.shape_cast %24 : vector<128xf32> to vector<1x128xf32>
      %26 = arith.addf %23, %25 : vector<1x128xf32>
      %c0_15 = arith.constant 0 : index
      %c0_16 = arith.constant 0 : index
      %27 = vector.load %arg8[%c0_15, %c0_16] : memref<1x128xf32, #tpu.memory_space<vmem>>, vector<1x128xf32>
      tpu.vector_store %arg8[%c0_15, %c0_16], %26 {strides = array<i32>} : memref<1x128xf32, #tpu.memory_space<vmem>>, vector<1x128xf32>,
      %c0_17 = arith.constant 0 : index
      %c0_18 = arith.constant 0 : index
      %28 = vector.load %arg9[%c0_17, %c0_18] : memref<1x128xf32, #tpu.memory_space<vmem>>, vector<1x128xf32>
      %29 = arith.mulf %20, %20 : vector<256x128xf32>
      %cst_19 = arith.constant dense<0.000000e+00> : vector<128xf32>
      %30 = vector.multi_reduction <add>, %29, %cst_19 [0] : vector<256x128xf32> to vector<128xf32>
      %31 = vector.shape_cast %30 : vector<128xf32> to vector<1x128xf32>
      %32 = arith.addf %28, %31 : vector<1x128xf32>
      %c0_20 = arith.constant 0 : index
      %c0_21 = arith.constant 0 : index
      %33 = vector.load %arg9[%c0_20, %c0_21] : memref<1x128xf32, #tpu.memory_space<vmem>>, vector<1x128xf32>
      tpu.vector_store %arg9[%c0_20, %c0_21], %32 {strides = array<i32>} : memref<1x128xf32, #tpu.memory_space<vmem>>, vector<1x128xf32>,
    } else {
    }
    %c1_i32 = arith.constant 1 : i32
    %10 = arith.cmpi eq, %arg0, %c1_i32 : i32
    %c0_i32_4 = arith.constant 0 : i32
    %11 = arith.cmpi eq, %arg1, %c0_i32_4 : i32
    %12 = arith.andi %10, %11 : i1
    %13 = arith.extui %12 : i1 to i32
    %c0_i32_5 = arith.constant 0 : i32
    %14 = arith.cmpi ne, %13, %c0_i32_5 : i32
    scf.if %14 {
      %c0 = arith.constant 0 : index
      %c0_8 = arith.constant 0 : index
      %18 = vector.load %arg8[%c0, %c0_8] : memref<1x128xf32, #tpu.memory_space<vmem>>, vector<1x128xf32>
      %cst = arith.constant 0.00255102036 : f32
      %19 = vector.broadcast %cst : f32 to vector<1x128xf32>
      %20 = arith.mulf %18, %19 : vector<1x128xf32>
      %c0_9 = arith.constant 0 : index
      %c0_10 = arith.constant 0 : index
      %21 = vector.load %arg9[%c0_9, %c0_10] : memref<1x128xf32, #tpu.memory_space<vmem>>, vector<1x128xf32>
      %cst_11 = arith.constant 0.00255102036 : f32
      %22 = vector.broadcast %cst_11 : f32 to vector<1x128xf32>
      %23 = arith.mulf %21, %22 : vector<1x128xf32>
      %24 = arith.mulf %20, %20 : vector<1x128xf32>
      %25 = arith.subf %23, %24 : vector<1x128xf32>
      %cst_12 = arith.constant 9.99999974E-6 : f32
      %26 = vector.broadcast %cst_12 : f32 to vector<1x128xf32>
      %27 = arith.addf %25, %26 : vector<1x128xf32>
      %28 = math.rsqrt %27 : vector<1x128xf32>
      %c0_13 = arith.constant 0 : index
      %c0_14 = arith.constant 0 : index
      %29 = vector.load %arg4[%c0_13, %c0_14] : memref<1x128xf32, #tpu.memory_space<vmem>>, vector<1x128xf32>
      %30 = arith.mulf %29, %28 : vector<1x128xf32>
      %c0_15 = arith.constant 0 : index
      %c0_16 = arith.constant 0 : index
      %31 = vector.load %arg10[%c0_15, %c0_16] : memref<1x128xf32, #tpu.memory_space<vmem>>, vector<1x128xf32>
      tpu.vector_store %arg10[%c0_15, %c0_16], %30 {strides = array<i32>} : memref<1x128xf32, #tpu.memory_space<vmem>>, vector<1x128xf32>,
      %c0_17 = arith.constant 0 : index
      %c0_18 = arith.constant 0 : index
      %32 = vector.load %arg5[%c0_17, %c0_18] : memref<1x128xf32, #tpu.memory_space<vmem>>, vector<1x128xf32>
      %c0_19 = arith.constant 0 : index
      %c0_20 = arith.constant 0 : index
      %33 = vector.load %arg4[%c0_19, %c0_20] : memref<1x128xf32, #tpu.memory_space<vmem>>, vector<1x128xf32>
      %34 = arith.mulf %20, %33 : vector<1x128xf32>
      %35 = arith.mulf %34, %28 : vector<1x128xf32>
      %36 = arith.subf %32, %35 : vector<1x128xf32>
      %c0_21 = arith.constant 0 : index
      %c0_22 = arith.constant 0 : index
      %37 = vector.load %arg11[%c0_21, %c0_22] : memref<1x128xf32, #tpu.memory_space<vmem>>, vector<1x128xf32>
      tpu.vector_store %arg11[%c0_21, %c0_22], %36 {strides = array<i32>} : memref<1x128xf32, #tpu.memory_space<vmem>>, vector<1x128xf32>,
    } else {
    }
    %c1_i32_6 = arith.constant 1 : i32
    %15 = arith.cmpi eq, %arg0, %c1_i32_6 : i32
    %16 = arith.extui %15 : i1 to i32
    %c0_i32_7 = arith.constant 0 : i32
    %17 = arith.cmpi ne, %16, %c0_i32_7 : i32
    scf.if %17 {
      %18 = arith.index_cast %1 : i32 to index
      %c0 = arith.constant 0 : index
      %19 = vector.load %arg7[%18, %c0] : memref<512x128xf32, #tpu.memory_space<vmem>>, vector<256x128xf32>
      %c0_8 = arith.constant 0 : index
      %c0_9 = arith.constant 0 : index
      %20 = vector.load %arg10[%c0_8, %c0_9] : memref<1x128xf32, #tpu.memory_space<vmem>>, vector<1x128xf32>
      %21 = vector.broadcast %20 : vector<1x128xf32> to vector<256x128xf32>
      %22 = arith.mulf %19, %21 : vector<256x128xf32>
      %c0_10 = arith.constant 0 : index
      %c0_11 = arith.constant 0 : index
      %23 = vector.load %arg11[%c0_10, %c0_11] : memref<1x128xf32, #tpu.memory_space<vmem>>, vector<1x128xf32>
      %24 = vector.broadcast %23 : vector<1x128xf32> to vector<256x128xf32>
      %25 = arith.addf %22, %24 : vector<256x128xf32>
      %26 = arith.negf %25 : vector<256x128xf32>
      %27 = math.exp %26 : vector<256x128xf32>
      %cst = arith.constant 1.000000e+00 : f32
      %28 = vector.broadcast %cst : f32 to vector<256x128xf32>
      %29 = arith.addf %28, %27 : vector<256x128xf32>
      %30 = arith.divf %28, %29 : vector<256x128xf32>
      %31 = arith.mulf %25, %30 : vector<256x128xf32>
      %c0_12 = arith.constant 0 : index
      %c0_13 = arith.constant 0 : index
      %32 = vector.load %arg6[%c0_12, %c0_13] : memref<256x128xf32, #tpu.memory_space<vmem>>, vector<256x128xf32>
      tpu.vector_store %arg6[%c0_12, %c0_13], %31 {strides = array<i32>} : memref<256x128xf32, #tpu.memory_space<vmem>>, vector<256x128xf32>,
    } else {
    }
    return
  }
  func.func @transform_0(%arg0: i32, %arg1: i32) -> (i32, i32) {
    %c1_i32 = arith.constant 1 : i32
    %0 = arith.subi %c1_i32, %arg0 : i32
    %1 = arith.muli %0, %arg1 : i32
    %c0_i32 = arith.constant 0 : i32
    %c0_i32_0 = arith.constant 0 : i32
    return %1, %c0_i32 : i32, i32
  }
  func.func @transform_1(%arg0: i32, %arg1: i32) -> (i32, i32) {
    %c0_i32 = arith.constant 0 : i32
    %c0_i32_0 = arith.constant 0 : i32
    %c0_i32_1 = arith.constant 0 : i32
    return %c0_i32, %c0_i32_0 : i32, i32
  }
  func.func @transform_2(%arg0: i32, %arg1: i32) -> (i32, i32) {
    %c0_i32 = arith.constant 0 : i32
    %c0_i32_0 = arith.constant 0 : i32
    %c0_i32_1 = arith.constant 0 : i32
    return %c0_i32, %c0_i32_0 : i32, i32
  }
  func.func @transform_3(%arg0: i32, %arg1: i32) -> (i32, i32) {
    %c0_i32 = arith.constant 0 : i32
    %c0_i32_0 = arith.constant 0 : i32
    %c0_i32_1 = arith.constant 0 : i32
    return %c0_i32, %c0_i32_0 : i32, i32
  }
  func.func @transform_4(%arg0: i32, %arg1: i32) -> (i32, i32) {
    %0 = arith.muli %arg0, %arg1 : i32
    %c0_i32 = arith.constant 0 : i32
    %c0_i32_0 = arith.constant 0 : i32
    return %0, %c0_i32 : i32, i32
  }
}

</mosaic_0001>

<llo_original>
// kernel: tpu_custom_call.1
$region0: #{tpu_custom_call.1}
  #allocation0 [shape = 'u32[]', space=smem, size = 0x4, offset = 0x4, fixed_abs, tag = 'smem constant byte address 0x4 - core index']
  #allocation1 [shape = 'u32[72,128]{1,0:T(1,128)}', space=vmem, size = 0x9000, scoped, tag = 'internal scratch']
  #allocation2 [shape = 'f32[512,128]{1,0:T(8,128)}', space=vmem, size = 0x40000, scoped, tag = 'scratch operand']
  #allocation3 [shape = 'f32[1,128]{1,0:T(1,128)}', space=vmem, size = 0x200, scoped, tag = 'scratch operand']
  #allocation4 [shape = 'f32[1,128]{1,0:T(1,128)}', space=vmem, size = 0x200, scoped, tag = 'scratch operand']
  #allocation5 [shape = 'f32[1,128]{1,0:T(1,128)}', space=vmem, size = 0x200, scoped, tag = 'scratch operand']
  #allocation6 [shape = 'f32[1,128]{1,0:T(1,128)}', space=vmem, size = 0x200, scoped, tag = 'scratch operand']
  %s0 = inlined_call_operand.vmem [shape: bf16[512,48], index: 0, kind: input, shape index: {}]
  %s1 = inlined_call_operand.vmem [shape: bf16[48,128], index: 1, kind: input, shape index: {}]
  %s2 = inlined_call_operand.vmem [shape: f32[1,128], index: 2, kind: input, shape index: {}]
  %s3 = inlined_call_operand.vmem [shape: f32[1,128], index: 3, kind: input, shape index: {}]
  %s4 = inlined_call_operand.hbm [shape: f32[512,128], index: 4, kind: output, shape index: {}]
  %s5 = sld [smem:[#allocation0]]
  $region65: #{tpu_custom_call.1} parent=0
    _
  %s7 = ssub.s32 1, %s5
  %s8 = scalar_select 0, %s7, %s5
  $region1: #{tpu_custom_call.1} parent=0
    #allocation7 [shape = 'u8[262144]{0}', space=vmem, size = 0x40000, scoped, tag = 'output window, operand 0']
    #allocation8 [shape = 's32[2]{0}', space=sflag, size = 0x8, scoped, tag = 'scoped memory for tpu_custom_call.1']
    %9 = vsyncpa [#allocation8], 0
    %s10 = scalar_lea.sflag [#allocation8], 1
    %11 = vsyncpa %s10, 0
    loop: start=0, step=1, limit=6
    $region2: #{tpu_custom_call.1} parent=1 // loop_pre_header
      _
    $region3: #{tpu_custom_call.1} parent=1 // loop_header
      %s13 = sphi 0, %s17
      %p14 = scmp.ge.s32.totalorder %s13, 6
      %s20 = sphi 0, %s32
      %s21 = sphi 0, %s28
      %s22 = sphi 0, %s20
      %s23 = sphi 0, %s21
      %s24 = sphi 0, %s22
      %s25 = sphi 0, %s23
      %s39 = sphi 0, %s41
      %s42 = sphi 0, %s39
      %s43 = sphi 0, %s42
      %s59 = sphi 0, %s43
      %s63 = sphi 0, %s63
      %s65 = sphi 0, %s63
      %s66 = sphi 0, %s65
      %s80 = sphi 0, %s66
      %s84 = sphi 0, %s84
      %s86 = sphi 0, %s84
      %s87 = sphi 0, %s86
      %s101 = sphi 0, %s87
      %s105 = sphi 0, %s105
      %s107 = sphi 0, %s105
      %s108 = sphi 0, %s107
      %s122 = sphi 0, %s108
      %s130 = sphi 0, %s132
      %s133 = sphi 0, %s130
      %s134 = sphi 0, %s133
      %s150 = sphi 0, %s134
    $region4: #{tpu_custom_call.1} parent=1 // loop_header_branch
      %16 = sbr.rel (%p14) target = $region8
    $region5: #{tpu_custom_call.1} parent=1 // loop_body
      %s18 = ssub.s32 %s13, 1
      %s19 = ssub.s32 %s13, 2
      %s26 = sadd.s32 1, %s21
      %p27 = scmp.ge.s32.totalorder %s26, 2
      %s28 = scalar_select %p27, 0, %s26
      %s29 = sadd.s32 1, %s20
      %s30 = scalar_select %p27, %s29, %s20
      %p31 = scmp.ge.s32.totalorder %s30, 2
      %s32 = scalar_select %p31, 0, %s30
      %s33 = ssub.s32 1, %s20
      %s34 = smul.u32 %s33, %s21
      %s35 = ssub.s32 1, %s32
      %s36 = smul.u32 %s35, %s28
      %s37 = ssub.s32 %s34, %s36
      %p38 = scmp.eq.s32.totalorder %s37, 0
      %s40 = sadd.s32 %s39, 1
      %s41 = scalar_select %p38, %s39, %s40
      %p44 = pneg %p38
      %p45 = scmp.eq.s32.totalorder %s13, 3
      %p46 = por %p44, %p45
      %p47 = scmp.ne.s32.totalorder %s39, %s42
      %p48 = scmp.eq.s32.totalorder %s13, 0
      %p49 = por %p47, %p48
      %p50 = scmp.ne.s32.totalorder %s39, %s42
      %p51 = scmp.eq.s32.totalorder %s18, 3
      %p52 = por %p50, %p51
      %p53 = scmp.ne.s32.totalorder %s42, %s43
      %p54 = scmp.eq.s32.totalorder %s18, 0
      %p55 = por %p53, %p54
      %p56 = scmp.ne.s32.totalorder %s42, %s43
      %p57 = scmp.eq.s32.totalorder %s19, 3
      %p58 = por %p56, %p57
      %p60 = scmp.ne.s32.totalorder %s43, %s59
      %p61 = scmp.eq.s32.totalorder %s19, 0
      %p62 = por %p60, %p61
      %s64 = sadd.s32 %s63, 1
      %p67 = scmp.eq.s32.totalorder %s13, 3
      %p68 = scmp.ne.s32.totalorder %s63, %s65
      %p69 = scmp.eq.s32.totalorder %s13, 0
      %p70 = por %p68, %p69
      %p71 = scmp.ne.s32.totalorder %s63, %s65
      %p72 = scmp.eq.s32.totalorder %s18, 3
      %p73 = por %p71, %p72
      %p74 = scmp.ne.s32.totalorder %s65, %s66
      %p75 = scmp.eq.s32.totalorder %s18, 0
      %p76 = por %p74, %p75
      %p77 = scmp.ne.s32.totalorder %s65, %s66
      %p78 = scmp.eq.s32.totalorder %s19, 3
      %p79 = por %p77, %p78
      %p81 = scmp.ne.s32.totalorder %s66, %s80
      %p82 = scmp.eq.s32.totalorder %s19, 0
      %p83 = por %p81, %p82
      %s85 = sadd.s32 %s84, 1
      %p88 = scmp.eq.s32.totalorder %s13, 3
      %p89 = scmp.ne.s32.totalorder %s84, %s86
      %p90 = scmp.eq.s32.totalorder %s13, 0
      %p91 = por %p89, %p90
      %p92 = scmp.ne.s32.totalorder %s84, %s86
      %p93 = scmp.eq.s32.totalorder %s18, 3
      %p94 = por %p92, %p93
      %p95 = scmp.ne.s32.totalorder %s86, %s87
      %p96 = scmp.eq.s32.totalorder %s18, 0
      %p97 = por %p95, %p96
      %p98 = scmp.ne.s32.totalorder %s86, %s87
      %p99 = scmp.eq.s32.totalorder %s19, 3
      %p100 = por %p98, %p99
      %p102 = scmp.ne.s32.totalorder %s87, %s101
      %p103 = scmp.eq.s32.totalorder %s19, 0
      %p104 = por %p102, %p103
      %s106 = sadd.s32 %s105, 1
      %p109 = scmp.eq.s32.totalorder %s13, 3
      %p110 = scmp.ne.s32.totalorder %s105, %s107
      %p111 = scmp.eq.s32.totalorder %s13, 0
      %p112 = por %p110, %p111
      %p113 = scmp.ne.s32.totalorder %s105, %s107
      %p114 = scmp.eq.s32.totalorder %s18, 3
      %p115 = por %p113, %p114
      %p116 = scmp.ne.s32.totalorder %s107, %s108
      %p117 = scmp.eq.s32.totalorder %s18, 0
      %p118 = por %p116, %p117
      %p119 = scmp.ne.s32.totalorder %s107, %s108
      %p120 = scmp.eq.s32.totalorder %s19, 3
      %p121 = por %p119, %p120
      %p123 = scmp.ne.s32.totalorder %s108, %s122
      %p124 = scmp.eq.s32.totalorder %s19, 0
      %p125 = por %p123, %p124
      %s126 = smul.u32 %s20, %s21
      %s127 = smul.u32 %s32, %s28
      %s128 = ssub.s32 %s126, %s127
      %p129 = scmp.eq.s32.totalorder %s128, 0
      %s131 = sadd.s32 %s130, 1
      %s132 = scalar_select %p129, %s130, %s131
      %p135 = pneg %p129
      %p136 = scmp.eq.s32.totalorder %s13, 3
      %p137 = por %p135, %p136
      %p138 = scmp.ne.s32.totalorder %s130, %s133
      %p139 = scmp.eq.s32.totalorder %s13, 0
      %p140 = por %p138, %p139
      %p141 = scmp.ne.s32.totalorder %s130, %s133
      %p142 = scmp.eq.s32.totalorder %s18, 3
      %p143 = por %p141, %p142
      %p144 = scmp.ne.s32.totalorder %s133, %s134
      %p145 = scmp.eq.s32.totalorder %s18, 0
      %p146 = por %p144, %p145
      %p147 = scmp.ne.s32.totalorder %s133, %s134
      %p148 = scmp.eq.s32.totalorder %s19, 3
      %p149 = por %p147, %p148
      %p151 = scmp.ne.s32.totalorder %s134, %s150
      %p152 = scmp.eq.s32.totalorder %s19, 0
      %p153 = por %p151, %p152
      %p154 = scmp.le.s32.totalorder 1, %s13
      %p155 = scmp.lt.s32.totalorder %s13, 5
      %p156 = pnand %p154, %p155
      %p157 = pneg %p156
      // Predicated region
      $region9: #{tpu_custom_call.1} parent=5 // pred_check
        _
      $region10: #{tpu_custom_call.1} parent=5 // pred_check_branch
        %159 = sbr.rel (%p156) target = $region12
      $region11: #{tpu_custom_call.1} parent=5 // pred_region
        %s160 = ssub.s32 %s13, 1
        // Predicated region
        $region13: #{tpu_custom_call.1} parent=11 // pred_check
          %p161 = pneg %p76
        $region14: #{tpu_custom_call.1} parent=11 // pred_check_branch
          %163 = sbr.rel (%p161) target = $region16
        $region15: #{tpu_custom_call.1} parent=11 // pred_region
          _
        $region16: #{tpu_custom_call.1} parent=11 // pred_fallthru
          _
        // Predicated region
        $region17: #{tpu_custom_call.1} parent=11 // pred_check
          %p164 = pneg %p97
        $region18: #{tpu_custom_call.1} parent=11 // pred_check_branch
          %166 = sbr.rel (%p164) target = $region20
        $region19: #{tpu_custom_call.1} parent=11 // pred_region
          _
        $region20: #{tpu_custom_call.1} parent=11 // pred_fallthru
          _
        // Predicated region
        $region21: #{tpu_custom_call.1} parent=11 // pred_check
          %p167 = pneg %p118
        $region22: #{tpu_custom_call.1} parent=11 // pred_check_branch
          %169 = sbr.rel (%p167) target = $region24
        $region23: #{tpu_custom_call.1} parent=11 // pred_region
          _
        $region24: #{tpu_custom_call.1} parent=11 // pred_fallthru
          _
      $region12: #{tpu_custom_call.1} parent=5 // pred_fallthru
        _
      %p170 = scmp.lt.s32.totalorder %s13, 4
      // Predicated region
      $region25: #{tpu_custom_call.1} parent=5 // pred_check
        %p171 = pneg %p170
      $region26: #{tpu_custom_call.1} parent=5 // pred_check_branch
        %173 = sbr.rel (%p171) target = $region28
      $region27: #{tpu_custom_call.1} parent=5 // pred_region
        // Predicated region
        $region29: #{tpu_custom_call.1} parent=27 // pred_check
          %p174 = pneg %p49
        $region30: #{tpu_custom_call.1} parent=27 // pred_check_branch
          %176 = sbr.rel (%p174) target = $region32
        $region31: #{tpu_custom_call.1} parent=27 // pred_region
          %s177 = ssub.s32 1, %s20
          %s178 = smul.u32 %s177, %s21
          %s179 = smul.u32 32, %s178
          %p180 = scmp.lt.s32.totalorder %s179, 63
          %s181 = scalar_select %p180, %s179, 63
          %s182 = smul.addr %s181, 4
          %s183 = scalar_lea.vmem %s0, %s182
          %s184 = ssub.s32 1, %s20
          %s185 = smul.u32 %s184, %s21
          %s186 = smul.u32 32, %s185
        $region32: #{tpu_custom_call.1} parent=27 // pred_fallthru
          _
      $region28: #{tpu_custom_call.1} parent=5 // pred_fallthru
        _
      %p187 = scmp.le.s32.totalorder 1, %s13
      %p188 = scmp.lt.s32.totalorder %s13, 5
      %p189 = pnand %p187, %p188
      %p190 = pneg %p189
      // Predicated region
      $region33: #{tpu_custom_call.1} parent=5 // pred_check
        _
      $region34: #{tpu_custom_call.1} parent=5 // pred_check_branch
        %192 = sbr.rel (%p189) target = $region36
      $region35: #{tpu_custom_call.1} parent=5 // pred_region
        %s193 = ssub.s32 %s13, 1
        %s194 = ssub.s32 1, %s22
        %s195 = smul.u32 %s194, %s23
        %s196 = smul.u32 32, %s195
        %p197 = scmp.lt.s32.totalorder %s196, 63
        %s198 = scalar_select %p197, %s196, 63
        %s199 = smul.addr %s198, 4
        %s200 = scalar_lea.vmem %s0, %s199
        %p201 = pneg %p55
        %p202 = pneg %p52
        %p203 = pneg %p76
        %p204 = pneg %p73
        %p205 = pneg %p97
        %p206 = pneg %p94
        %p207 = pneg %p118
        %p208 = pneg %p115
        %p209 = pneg %p146
        %p210 = pneg %p143
        %s211 = sand.u32 %s133, 1
        %s212 = scalar_lea.sflag [#allocation8], %s211
        %s213 = sand.u32 %s133, 1
        %s214 = smul.addr %s213, 256
        %s215 = scalar_lea.vmem [#allocation7], %s214
        %s216 = ssub.s32 1, %s22
        %s217 = smul.u32 %s216, %s23
        %s218 = smul.u32 32, %s217
        %p219 = scmp.lt.s32.totalorder %s218, 63
        %s220 = scalar_select %p219, %s218, 63
        %s221 = smul.addr %s220, 4
        %s222 = scalar_lea.vmem %s0, %s221
        %s223 = ssub.s32 1, %s22
        %s224 = smul.u32 %s223, %s23
        %s225 = smul.u32 32, %s224
        %s226 = smul.u32 %s22, %s23
        %s227 = smul.u32 32, %s226
        %s229 = smul.u32 %s23, 256
        %p230 = scmp.eq.s32.totalorder %s22, 0
        %p231 = scmp.eq.s32.totalorder %s23, 0
        %p232 = pnand %p230, %p231
        %p233 = pneg %p232
        // Predicated region
        $region37: #{tpu_custom_call.1} parent=35 // pred_check
          _
        $region38: #{tpu_custom_call.1} parent=35 // pred_check_branch
          %235 = sbr.rel (%p232) target = $region40
        $region39: #{tpu_custom_call.1} parent=35 // pred_region
          %236 = vst [vmem:[#allocation3] sm:$0x1] 0.0
          %237 = vst [vmem:[#allocation4] sm:$0x1] 0.0
        $region40: #{tpu_custom_call.1} parent=35 // pred_fallthru
          _
        // Predicated region
        $region41: #{tpu_custom_call.1} parent=35 // pred_check
          %p238 = pneg %p230
        $region42: #{tpu_custom_call.1} parent=35 // pred_check_branch
          %240 = sbr.rel (%p238) target = $region44
        $region43: #{tpu_custom_call.1} parent=35 // pred_region
          %v241 = vld [vmem:[%s222] sm:$0xf]
          %v242 = vld [vmem:[%s222 + $0x4] sm:$0xf]
          %v243 = vld [vmem:[%s222 + $0x8] sm:$0xf]
          %v244 = vld [vmem:[%s222 + $0xc] sm:$0xf]
          %v245 = vld [vmem:[%s222 + $0x10] sm:$0xf]
          %v246 = vld [vmem:[%s222 + $0x14] sm:$0xf]
          %v247 = vld [vmem:[%s222 + $0x18] sm:$0xf]
          %v248 = vld [vmem:[%s222 + $0x1c] sm:$0xf]
          %v249 = vld [vmem:[%s222 + $0x20] sm:$0xf]
          %v250 = vld [vmem:[%s222 + $0x24] sm:$0xf]
          %v251 = vld [vmem:[%s222 + $0x28] sm:$0xf]
          %v252 = vld [vmem:[%s222 + $0x2c] sm:$0xf]
          %v253 = vld [vmem:[%s222 + $0x30] sm:$0xf]
          %v254 = vld [vmem:[%s222 + $0x34] sm:$0xf]
          %v255 = vld [vmem:[%s222 + $0x38] sm:$0xf]
          %v256 = vld [vmem:[%s222 + $0x3c] sm:$0xf]
          %v257 = vld [vmem:[%s222 + $0x40] sm:$0xf]
          %v258 = vld [vmem:[%s222 + $0x44] sm:$0xf]
          %v259 = vld [vmem:[%s222 + $0x48] sm:$0xf]
          %v260 = vld [vmem:[%s222 + $0x4c] sm:$0xf]
          %v261 = vld [vmem:[%s222 + $0x50] sm:$0xf]
          %v262 = vld [vmem:[%s222 + $0x54] sm:$0xf]
          %v263 = vld [vmem:[%s222 + $0x58] sm:$0xf]
          %v264 = vld [vmem:[%s222 + $0x5c] sm:$0xf]
          %v265 = vld [vmem:[%s222 + $0x60] sm:$0xf]
          %v266 = vld [vmem:[%s222 + $0x64] sm:$0xf]
          %v267 = vld [vmem:[%s222 + $0x68] sm:$0xf]
          %v268 = vld [vmem:[%s222 + $0x6c] sm:$0xf]
          %v269 = vld [vmem:[%s222 + $0x70] sm:$0xf]
          %v270 = vld [vmem:[%s222 + $0x74] sm:$0xf]
          %v271 = vld [vmem:[%s222 + $0x78] sm:$0xf]
          %v272 = vld [vmem:[%s222 + $0x7c] sm:$0xf]
          %v273 = vld [vmem:[%s1] sm:$0xf]
          %v274 = vld [vmem:[%s1 + $0x4] sm:$0xf]
          %v275 = vld [vmem:[%s1 + $0x8] sm:$0xf]
          %v276 = vld [vmem:[%s1 + $0xc] sm:$0xf]
          %v277 = vld [vmem:[%s1 + $0x10] sm:$0xf]
          %v278 = vld [vmem:[%s1 + $0x14] sm:$0xf]
          %v311 = vunpack.c.l.b16 %v241
          %v312 = vunpack.c.l.b16 %v242
          %v313 = vunpack.c.l.b16 %v243
          %v314 = vunpack.c.l.b16 %v244
          %v315 = vunpack.c.l.b16 %v245
          %v316 = vunpack.c.l.b16 %v246
          %v317 = vunpack.c.l.b16 %v247
          %v318 = vunpack.c.l.b16 %v248
          %v319 = vunpack.c.l.b16 %v249
          %v320 = vunpack.c.l.b16 %v250
          %v321 = vunpack.c.l.b16 %v251
          %v322 = vunpack.c.l.b16 %v252
          %v323 = vunpack.c.l.b16 %v253
          %v324 = vunpack.c.l.b16 %v254
          %v325 = vunpack.c.l.b16 %v255
          %v326 = vunpack.c.l.b16 %v256
          %v327 = vunpack.c.l.b16 %v257
          %v328 = vunpack.c.l.b16 %v258
          %v329 = vunpack.c.l.b16 %v259
          %v330 = vunpack.c.l.b16 %v260
          %v331 = vunpack.c.l.b16 %v261
          %v332 = vunpack.c.l.b16 %v262
          %v333 = vunpack.c.l.b16 %v263
          %v334 = vunpack.c.l.b16 %v264
          %v335 = vunpack.c.l.b16 %v265
          %v336 = vunpack.c.l.b16 %v266
          %v337 = vunpack.c.l.b16 %v267
          %v338 = vunpack.c.l.b16 %v268
          %v339 = vunpack.c.l.b16 %v269
          %v340 = vunpack.c.l.b16 %v270
          %v341 = vunpack.c.l.b16 %v271
          %v342 = vunpack.c.l.b16 %v272
          %v343 = vpack.c.b16 %v312, %v311
          %v344 = vpack.c.b16 %v314, %v313
          %v345 = vpack.c.b16 %v316, %v315
          %v346 = vpack.c.b16 %v318, %v317
          %v347 = vpack.c.b16 %v320, %v319
          %v348 = vpack.c.b16 %v322, %v321
          %v349 = vpack.c.b16 %v324, %v323
          %v350 = vpack.c.b16 %v326, %v325
          %v351 = vpack.c.b16 %v328, %v327
          %v352 = vpack.c.b16 %v330, %v329
          %v353 = vpack.c.b16 %v332, %v331
          %v354 = vpack.c.b16 %v334, %v333
          %v355 = vpack.c.b16 %v336, %v335
          %v356 = vpack.c.b16 %v338, %v337
          %v357 = vpack.c.b16 %v340, %v339
          %v358 = vpack.c.b16 %v342, %v341
          %v365 = vunpack.c.l.b16 %v273
          %v366 = vunpack.c.l.b16 %v274
          %v367 = vunpack.c.l.b16 %v275
          %v368 = vunpack.c.l.b16 %v276
          %v369 = vunpack.c.l.b16 %v277
          %v370 = vunpack.c.l.b16 %v278
          %v371 = vpack.c.b16 %v366, %v365
          %v372 = vpack.c.b16 %v368, %v367
          %v373 = vpack.c.b16 %v370, %v369
          %vm377 = vcmask 392192
          %v379 = vsel %vm377, %v343, 0
          %v382 = vsel %vm377, %v344, 0
          %v385 = vsel %vm377, %v345, 0
          %v388 = vsel %vm377, %v346, 0
          %v391 = vsel %vm377, %v347, 0
          %v394 = vsel %vm377, %v348, 0
          %v397 = vsel %vm377, %v349, 0
          %v400 = vsel %vm377, %v350, 0
          %v403 = vsel %vm377, %v351, 0
          %v406 = vsel %vm377, %v352, 0
          %v409 = vsel %vm377, %v353, 0
          %v412 = vsel %vm377, %v354, 0
          %v415 = vsel %vm377, %v355, 0
          %v418 = vsel %vm377, %v356, 0
          %v421 = vsel %vm377, %v357, 0
          %v424 = vsel %vm377, %v358, 0
          %426 = vmatpush.bf16.msra.mxu0 0
          %427 = vmatpush.bf16.msra.mxu0 0
          %428 = vmatpush.bf16.msra.mxu0 0
          %429 = vmatpush.bf16.msra.mxu0 0
          %430 = vmatpush.bf16.msra.mxu0 0
          %431 = vmatpush.bf16.msra.mxu0 %v373
          %432 = vmatpush.bf16.msra.mxu0 %v372
          %433 = vmatpush.bf16.msra.mxu0 %v371
          %434 = vmatmul.bf16.gmra.mxu0 %v379
          %v435 = vpop.f32.mrf.mxu0
          %v436 = vadd.f32 0.0, %v435
          %v437 = vpop.f32.mrf.mxu0
          %v438 = vadd.f32 0.0, %v437
          %439 = vmatmul.bf16.gmra.mxu0 %v382
          %v440 = vpop.f32.mrf.mxu0
          %v441 = vadd.f32 0.0, %v440
          %v442 = vpop.f32.mrf.mxu0
          %v443 = vadd.f32 0.0, %v442
          %444 = vmatmul.bf16.gmra.mxu0 %v385
          %v445 = vpop.f32.mrf.mxu0
          %v446 = vadd.f32 0.0, %v445
          %v447 = vpop.f32.mrf.mxu0
          %v448 = vadd.f32 0.0, %v447
          %449 = vmatmul.bf16.gmra.mxu0 %v388
          %v450 = vpop.f32.mrf.mxu0
          %v451 = vadd.f32 0.0, %v450
          %v452 = vpop.f32.mrf.mxu0
          %v453 = vadd.f32 0.0, %v452
          %454 = vmatmul.bf16.gmra.mxu0 %v391
          %v455 = vpop.f32.mrf.mxu0
          %v456 = vadd.f32 0.0, %v455
          %v457 = vpop.f32.mrf.mxu0
          %v458 = vadd.f32 0.0, %v457
          %459 = vmatmul.bf16.gmra.mxu0 %v394
          %v460 = vpop.f32.mrf.mxu0
          %v461 = vadd.f32 0.0, %v460
          %v462 = vpop.f32.mrf.mxu0
          %v463 = vadd.f32 0.0, %v462
          %464 = vmatmul.bf16.gmra.mxu0 %v397
          %v465 = vpop.f32.mrf.mxu0
          %v466 = vadd.f32 0.0, %v465
          %v467 = vpop.f32.mrf.mxu0
          %v468 = vadd.f32 0.0, %v467
          %469 = vmatmul.bf16.gmra.mxu0 %v400
          %v470 = vpop.f32.mrf.mxu0
          %v471 = vadd.f32 0.0, %v470
          %v472 = vpop.f32.mrf.mxu0
          %v473 = vadd.f32 0.0, %v472
          %474 = vmatmul.bf16.gmra.mxu0 %v403
          %v475 = vpop.f32.mrf.mxu0
          %v476 = vadd.f32 0.0, %v475
          %v477 = vpop.f32.mrf.mxu0
          %v478 = vadd.f32 0.0, %v477
          %479 = vmatmul.bf16.gmra.mxu0 %v406
          %v480 = vpop.f32.mrf.mxu0
          %v481 = vadd.f32 0.0, %v480
          %v482 = vpop.f32.mrf.mxu0
          %v483 = vadd.f32 0.0, %v482
          %484 = vmatmul.bf16.gmra.mxu0 %v409
          %v485 = vpop.f32.mrf.mxu0
          %v486 = vadd.f32 0.0, %v485
          %v487 = vpop.f32.mrf.mxu0
          %v488 = vadd.f32 0.0, %v487
          %489 = vmatmul.bf16.gmra.mxu0 %v412
          %v490 = vpop.f32.mrf.mxu0
          %v491 = vadd.f32 0.0, %v490
          %v492 = vpop.f32.mrf.mxu0
          %v493 = vadd.f32 0.0, %v492
          %494 = vmatmul.bf16.gmra.mxu0 %v415
          %v495 = vpop.f32.mrf.mxu0
          %v496 = vadd.f32 0.0, %v495
          %v497 = vpop.f32.mrf.mxu0
          %v498 = vadd.f32 0.0, %v497
          %499 = vmatmul.bf16.gmra.mxu0 %v418
          %v500 = vpop.f32.mrf.mxu0
          %v501 = vadd.f32 0.0, %v500
          %v502 = vpop.f32.mrf.mxu0
          %v503 = vadd.f32 0.0, %v502
          %504 = vmatmul.bf16.gmra.mxu0 %v421
          %v505 = vpop.f32.mrf.mxu0
          %v506 = vadd.f32 0.0, %v505
          %v507 = vpop.f32.mrf.mxu0
          %v508 = vadd.f32 0.0, %v507
          %509 = vmatmul.bf16.gmra.mxu0 %v424
          %v510 = vpop.f32.mrf.mxu0
          %v511 = vadd.f32 0.0, %v510
          %v512 = vpop.f32.mrf.mxu0
          %v513 = vadd.f32 0.0, %v512
          %514 = vdwg.mxu0
          %s515 = scalar_lea.vmem [#allocation2], %s229
          %516 = vst [vmem:[%s515] sm:$0xff] %v436
          %517 = vst [vmem:[%s515 + $0x8] sm:$0xff] %v438
          %518 = vst [vmem:[%s515 + $0x10] sm:$0xff] %v441
          %519 = vst [vmem:[%s515 + $0x18] sm:$0xff] %v443
          %520 = vst [vmem:[%s515 + $0x20] sm:$0xff] %v446
          %521 = vst [vmem:[%s515 + $0x28] sm:$0xff] %v448
          %522 = vst [vmem:[%s515 + $0x30] sm:$0xff] %v451
          %523 = vst [vmem:[%s515 + $0x38] sm:$0xff] %v453
          %524 = vst [vmem:[%s515 + $0x40] sm:$0xff] %v456
          %525 = vst [vmem:[%s515 + $0x48] sm:$0xff] %v458
          %526 = vst [vmem:[%s515 + $0x50] sm:$0xff] %v461
          %527 = vst [vmem:[%s515 + $0x58] sm:$0xff] %v463
          %528 = vst [vmem:[%s515 + $0x60] sm:$0xff] %v466
          %529 = vst [vmem:[%s515 + $0x68] sm:$0xff] %v468
          %530 = vst [vmem:[%s515 + $0x70] sm:$0xff] %v471
          %531 = vst [vmem:[%s515 + $0x78] sm:$0xff] %v473
          %532 = vst [vmem:[%s515 + $0x80] sm:$0xff] %v476
          %533 = vst [vmem:[%s515 + $0x88] sm:$0xff] %v478
          %534 = vst [vmem:[%s515 + $0x90] sm:$0xff] %v481
          %535 = vst [vmem:[%s515 + $0x98] sm:$0xff] %v483
          %536 = vst [vmem:[%s515 + $0xa0] sm:$0xff] %v486
          %537 = vst [vmem:[%s515 + $0xa8] sm:$0xff] %v488
          %538 = vst [vmem:[%s515 + $0xb0] sm:$0xff] %v491
          %539 = vst [vmem:[%s515 + $0xb8] sm:$0xff] %v493
          %540 = vst [vmem:[%s515 + $0xc0] sm:$0xff] %v496
          %541 = vst [vmem:[%s515 + $0xc8] sm:$0xff] %v498
          %542 = vst [vmem:[%s515 + $0xd0] sm:$0xff] %v501
          %543 = vst [vmem:[%s515 + $0xd8] sm:$0xff] %v503
          %544 = vst [vmem:[%s515 + $0xe0] sm:$0xff] %v506
          %545 = vst [vmem:[%s515 + $0xe8] sm:$0xff] %v508
          %546 = vst [vmem:[%s515 + $0xf0] sm:$0xff] %v511
          %547 = vst [vmem:[%s515 + $0xf8] sm:$0xff] %v513
          %v548 = vld [vmem:[#allocation3] sm:$0x1]
          %v549 = vadd.f32 %v436, %v438
          %v550 = vadd.f32 %v549, %v441
          %v551 = vadd.f32 %v550, %v443
          %v552 = vadd.f32 %v551, %v446
          %v553 = vadd.f32 %v552, %v448
          %v554 = vadd.f32 %v553, %v451
          %v555 = vadd.f32 %v554, %v453
          %v556 = vadd.f32 %v555, %v456
          %v557 = vadd.f32 %v556, %v458
          %v558 = vadd.f32 %v557, %v461
          %v559 = vadd.f32 %v558, %v463
          %v560 = vadd.f32 %v559, %v466
          %v561 = vadd.f32 %v560, %v468
          %v562 = vadd.f32 %v561, %v471
          %v563 = vadd.f32 %v562, %v473
          %v564 = vadd.f32 %v563, %v476
          %v565 = vadd.f32 %v564, %v478
          %v566 = vadd.f32 %v565, %v481
          %v567 = vadd.f32 %v566, %v483
          %v568 = vadd.f32 %v567, %v486
          %v569 = vadd.f32 %v568, %v488
          %v570 = vadd.f32 %v569, %v491
          %v571 = vadd.f32 %v570, %v493
          %v572 = vadd.f32 %v571, %v496
          %v573 = vadd.f32 %v572, %v498
          %v574 = vadd.f32 %v573, %v501
          %v575 = vadd.f32 %v574, %v503
          %v576 = vadd.f32 %v575, %v506
          %v577 = vadd.f32 %v576, %v508
          %v578 = vadd.f32 %v577, %v511
          %v579 = vadd.f32 %v578, %v513
          %v580 = vrot.slane %v579, 4
          %v581 = vadd.f32 %v579, %v580
          %v582 = vrot.slane %v581, 2
          %v583 = vadd.f32 %v581, %v582
          %v584 = vrot.slane %v583, 1
          %v585 = vadd.f32 %v583, %v584
          %v586 = vadd.f32 %v548, %v585
          %587 = vst [vmem:[#allocation3] sm:$0x1] %v586
          %v588 = vld [vmem:[#allocation4] sm:$0x1]
          %v589 = vmul.f32 %v436, %v436
          %v590 = vmul.f32 %v438, %v438
          %v591 = vmul.f32 %v441, %v441
          %v592 = vmul.f32 %v443, %v443
          %v593 = vmul.f32 %v446, %v446
          %v594 = vmul.f32 %v448, %v448
          %v595 = vmul.f32 %v451, %v451
          %v596 = vmul.f32 %v453, %v453
          %v597 = vmul.f32 %v456, %v456
          %v598 = vmul.f32 %v458, %v458
          %v599 = vmul.f32 %v461, %v461
          %v600 = vmul.f32 %v463, %v463
          %v601 = vmul.f32 %v466, %v466
          %v602 = vmul.f32 %v468, %v468
          %v603 = vmul.f32 %v471, %v471
          %v604 = vmul.f32 %v473, %v473
          %v605 = vmul.f32 %v476, %v476
          %v606 = vmul.f32 %v478, %v478
          %v607 = vmul.f32 %v481, %v481
          %v608 = vmul.f32 %v483, %v483
          %v609 = vmul.f32 %v486, %v486
          %v610 = vmul.f32 %v488, %v488
          %v611 = vmul.f32 %v491, %v491
          %v612 = vmul.f32 %v493, %v493
          %v613 = vmul.f32 %v496, %v496
          %v614 = vmul.f32 %v498, %v498
          %v615 = vmul.f32 %v501, %v501
          %v616 = vmul.f32 %v503, %v503
          %v617 = vmul.f32 %v506, %v506
          %v618 = vmul.f32 %v508, %v508
          %v619 = vmul.f32 %v511, %v511
          %v620 = vmul.f32 %v513, %v513
          %v621 = vadd.f32 %v589, %v590
          %v622 = vadd.f32 %v621, %v591
          %v623 = vadd.f32 %v622, %v592
          %v624 = vadd.f32 %v623, %v593
          %v625 = vadd.f32 %v624, %v594
          %v626 = vadd.f32 %v625, %v595
          %v627 = vadd.f32 %v626, %v596
          %v628 = vadd.f32 %v627, %v597
          %v629 = vadd.f32 %v628, %v598
          %v630 = vadd.f32 %v629, %v599
          %v631 = vadd.f32 %v630, %v600
          %v632 = vadd.f32 %v631, %v601
          %v633 = vadd.f32 %v632, %v602
          %v634 = vadd.f32 %v633, %v603
          %v635 = vadd.f32 %v634, %v604
          %v636 = vadd.f32 %v635, %v605
          %v637 = vadd.f32 %v636, %v606
          %v638 = vadd.f32 %v637, %v607
          %v639 = vadd.f32 %v638, %v608
          %v640 = vadd.f32 %v639, %v609
          %v641 = vadd.f32 %v640, %v610
          %v642 = vadd.f32 %v641, %v611
          %v643 = vadd.f32 %v642, %v612
          %v644 = vadd.f32 %v643, %v613
          %v645 = vadd.f32 %v644, %v614
          %v646 = vadd.f32 %v645, %v615
          %v647 = vadd.f32 %v646, %v616
          %v648 = vadd.f32 %v647, %v617
          %v649 = vadd.f32 %v648, %v618
          %v650 = vadd.f32 %v649, %v619
          %v651 = vadd.f32 %v650, %v620
          %v652 = vrot.slane %v651, 4
          %v653 = vadd.f32 %v651, %v652
          %v654 = vrot.slane %v653, 2
          %v655 = vadd.f32 %v653, %v654
          %v656 = vrot.slane %v655, 1
          %v657 = vadd.f32 %v655, %v656
          %v658 = vadd.f32 %v588, %v657
          %659 = vst [vmem:[#allocation4] sm:$0x1] %v658
        $region44: #{tpu_custom_call.1} parent=35 // pred_fallthru
          _
        %p660 = scmp.eq.s32.totalorder %s22, 1
        %p661 = pnand %p660, %p231
        %p662 = pneg %p661
        // Predicated region
        $region45: #{tpu_custom_call.1} parent=35 // pred_check
          _
        $region46: #{tpu_custom_call.1} parent=35 // pred_check_branch
          %664 = sbr.rel (%p661) target = $region48
        $region47: #{tpu_custom_call.1} parent=35 // pred_region
          %v665 = vld [vmem:[#allocation3] sm:$0x1]
          %v666 = vmul.f32 %v665, 0.0025510204
          %v667 = vld [vmem:[#allocation4] sm:$0x1]
          %v668 = vmul.f32 %v667, 0.0025510204
          %v669 = vmul.f32 %v666, %v666
          %v670 = vsub.f32 %v668, %v669
          %v671 = vadd.f32 %v670, 1e-05
          %v672 = vrsqrt.pop %v671
          %v673 = vmul.f32 %v672, %v671
          %v674 = vmul.f32 %v673, %v672
          %v675 = vmul.f32 0.5, %v674
          %v676 = vsub.f32 1.5, %v675
          %v677 = vmul.f32 %v672, %v676
          %vm678 = vweird.f32 %v671
          %vm679 = vweird.f32 %v672
          %vm680 = vmor %vm678, %vm679
          %v681 = vsel %vm680, %v672, %v677
          %v682 = vld [vmem:[%s2] sm:$0x1]
          %v683 = vmul.f32 %v682, %v681
          %684 = vst [vmem:[#allocation5] sm:$0x1] %v683
          %v685 = vld [vmem:[%s3] sm:$0x1]
          %v686 = vld [vmem:[%s2] sm:$0x1]
          %v687 = vmul.f32 %v666, %v686
          %v688 = vmul.f32 %v687, %v681
          %v689 = vsub.f32 %v685, %v688
          %690 = vst [vmem:[#allocation6] sm:$0x1] %v689
        $region48: #{tpu_custom_call.1} parent=35 // pred_fallthru
          _
        // Predicated region
        $region49: #{tpu_custom_call.1} parent=35 // pred_check
          %p691 = pneg %p660
        $region50: #{tpu_custom_call.1} parent=35 // pred_check_branch
          %693 = sbr.rel (%p691) target = $region52
        $region51: #{tpu_custom_call.1} parent=35 // pred_region
          %s694 = scalar_lea.vmem [#allocation2], %s229
          %v695 = vld [vmem:[%s694] sm:$0xff]
          %v696 = vld [vmem:[%s694 + $0x8] sm:$0xff]
          %v697 = vld [vmem:[%s694 + $0x10] sm:$0xff]
          %v698 = vld [vmem:[%s694 + $0x18] sm:$0xff]
          %v699 = vld [vmem:[%s694 + $0x20] sm:$0xff]
          %v700 = vld [vmem:[%s694 + $0x28] sm:$0xff]
          %v701 = vld [vmem:[%s694 + $0x30] sm:$0xff]
          %v702 = vld [vmem:[%s694 + $0x38] sm:$0xff]
          %v703 = vld [vmem:[%s694 + $0x40] sm:$0xff]
          %v704 = vld [vmem:[%s694 + $0x48] sm:$0xff]
          %v705 = vld [vmem:[%s694 + $0x50] sm:$0xff]
          %v706 = vld [vmem:[%s694 + $0x58] sm:$0xff]
          %v707 = vld [vmem:[%s694 + $0x60] sm:$0xff]
          %v708 = vld [vmem:[%s694 + $0x68] sm:$0xff]
          %v709 = vld [vmem:[%s694 + $0x70] sm:$0xff]
          %v710 = vld [vmem:[%s694 + $0x78] sm:$0xff]
          %v711 = vld [vmem:[%s694 + $0x80] sm:$0xff]
          %v712 = vld [vmem:[%s694 + $0x88] sm:$0xff]
          %v713 = vld [vmem:[%s694 + $0x90] sm:$0xff]
          %v714 = vld [vmem:[%s694 + $0x98] sm:$0xff]
          %v715 = vld [vmem:[%s694 + $0xa0] sm:$0xff]
          %v716 = vld [vmem:[%s694 + $0xa8] sm:$0xff]
          %v717 = vld [vmem:[%s694 + $0xb0] sm:$0xff]
          %v718 = vld [vmem:[%s694 + $0xb8] sm:$0xff]
          %v719 = vld [vmem:[%s694 + $0xc0] sm:$0xff]
          %v720 = vld [vmem:[%s694 + $0xc8] sm:$0xff]
          %v721 = vld [vmem:[%s694 + $0xd0] sm:$0xff]
          %v722 = vld [vmem:[%s694 + $0xd8] sm:$0xff]
          %v723 = vld [vmem:[%s694 + $0xe0] sm:$0xff]
          %v724 = vld [vmem:[%s694 + $0xe8] sm:$0xff]
          %v725 = vld [vmem:[%s694 + $0xf0] sm:$0xff]
          %v726 = vld [vmem:[%s694 + $0xf8] sm:$0xff]
          %v727 = vld [vmem:[#allocation5] sm:$0x1]
          %v729 = vperm.slane %v727, 0
          %v731 = vmul.f32 %v695, %v729
          %v732 = vmul.f32 %v696, %v729
          %v733 = vmul.f32 %v697, %v729
          %v734 = vmul.f32 %v698, %v729
          %v735 = vmul.f32 %v699, %v729
          %v736 = vmul.f32 %v700, %v729
          %v737 = vmul.f32 %v701, %v729
          %v738 = vmul.f32 %v702, %v729
          %v739 = vmul.f32 %v703, %v729
          %v740 = vmul.f32 %v704, %v729
          %v741 = vmul.f32 %v705, %v729
          %v742 = vmul.f32 %v706, %v729
          %v743 = vmul.f32 %v707, %v729
          %v744 = vmul.f32 %v708, %v729
          %v745 = vmul.f32 %v709, %v729
          %v746 = vmul.f32 %v710, %v729
          %v747 = vmul.f32 %v711, %v729
          %v748 = vmul.f32 %v712, %v729
          %v749 = vmul.f32 %v713, %v729
          %v750 = vmul.f32 %v714, %v729
          %v751 = vmul.f32 %v715, %v729
          %v752 = vmul.f32 %v716, %v729
          %v753 = vmul.f32 %v717, %v729
          %v754 = vmul.f32 %v718, %v729
          %v755 = vmul.f32 %v719, %v729
          %v756 = vmul.f32 %v720, %v729
          %v757 = vmul.f32 %v721, %v729
          %v758 = vmul.f32 %v722, %v729
          %v759 = vmul.f32 %v723, %v729
          %v760 = vmul.f32 %v724, %v729
          %v761 = vmul.f32 %v725, %v729
          %v762 = vmul.f32 %v726, %v729
          %v763 = vld [vmem:[#allocation6] sm:$0x1]
          %v765 = vperm.slane %v763, 0
          %v767 = vadd.f32 %v731, %v765
          %v768 = vadd.f32 %v732, %v765
          %v769 = vadd.f32 %v733, %v765
          %v770 = vadd.f32 %v734, %v765
          %v771 = vadd.f32 %v735, %v765
          %v772 = vadd.f32 %v736, %v765
          %v773 = vadd.f32 %v737, %v765
          %v774 = vadd.f32 %v738, %v765
          %v775 = vadd.f32 %v739, %v765
          %v776 = vadd.f32 %v740, %v765
          %v777 = vadd.f32 %v741, %v765
          %v778 = vadd.f32 %v742, %v765
          %v779 = vadd.f32 %v743, %v765
          %v780 = vadd.f32 %v744, %v765
          %v781 = vadd.f32 %v745, %v765
          %v782 = vadd.f32 %v746, %v765
          %v783 = vadd.f32 %v747, %v765
          %v784 = vadd.f32 %v748, %v765
          %v785 = vadd.f32 %v749, %v765
          %v786 = vadd.f32 %v750, %v765
          %v787 = vadd.f32 %v751, %v765
          %v788 = vadd.f32 %v752, %v765
          %v789 = vadd.f32 %v753, %v765
          %v790 = vadd.f32 %v754, %v765
          %v791 = vadd.f32 %v755, %v765
          %v792 = vadd.f32 %v756, %v765
          %v793 = vadd.f32 %v757, %v765
          %v794 = vadd.f32 %v758, %v765
          %v795 = vadd.f32 %v759, %v765
          %v796 = vadd.f32 %v760, %v765
          %v797 = vadd.f32 %v761, %v765
          %v798 = vadd.f32 %v762, %v765
          %v799 = vxor.u32 %v767, 2147483648
          %v800 = vxor.u32 %v768, 2147483648
          %v801 = vxor.u32 %v769, 2147483648
          %v802 = vxor.u32 %v770, 2147483648
          %v803 = vxor.u32 %v771, 2147483648
          %v804 = vxor.u32 %v772, 2147483648
          %v805 = vxor.u32 %v773, 2147483648
          %v806 = vxor.u32 %v774, 2147483648
          %v807 = vxor.u32 %v775, 2147483648
          %v808 = vxor.u32 %v776, 2147483648
          %v809 = vxor.u32 %v777, 2147483648
          %v810 = vxor.u32 %v778, 2147483648
          %v811 = vxor.u32 %v779, 2147483648
          %v812 = vxor.u32 %v780, 2147483648
          %v813 = vxor.u32 %v781, 2147483648
          %v814 = vxor.u32 %v782, 2147483648
          %v815 = vxor.u32 %v783, 2147483648
          %v816 = vxor.u32 %v784, 2147483648
          %v817 = vxor.u32 %v785, 2147483648
          %v818 = vxor.u32 %v786, 2147483648
          %v819 = vxor.u32 %v787, 2147483648
          %v820 = vxor.u32 %v788, 2147483648
          %v821 = vxor.u32 %v789, 2147483648
          %v822 = vxor.u32 %v790, 2147483648
          %v823 = vxor.u32 %v791, 2147483648
          %v824 = vxor.u32 %v792, 2147483648
          %v825 = vxor.u32 %v793, 2147483648
          %v826 = vxor.u32 %v794, 2147483648
          %v827 = vxor.u32 %v795, 2147483648
          %v828 = vxor.u32 %v796, 2147483648
          %v829 = vxor.u32 %v797, 2147483648
          %v830 = vxor.u32 %v798, 2147483648
          %v831 = vmul.f32 %v799, 1.442695
          %v832 = vpow.pop %v831
          %v833 = vmul.f32 %v800, 1.442695
          %v834 = vpow.pop %v833
          %v835 = vmul.f32 %v801, 1.442695
          %v836 = vpow.pop %v835
          %v837 = vmul.f32 %v802, 1.442695
          %v838 = vpow.pop %v837
          %v839 = vmul.f32 %v803, 1.442695
          %v840 = vpow.pop %v839
          %v841 = vmul.f32 %v804, 1.442695
          %v842 = vpow.pop %v841
          %v843 = vmul.f32 %v805, 1.442695
          %v844 = vpow.pop %v843
          %v845 = vmul.f32 %v806, 1.442695
          %v846 = vpow.pop %v845
          %v847 = vmul.f32 %v807, 1.442695
          %v848 = vpow.pop %v847
          %v849 = vmul.f32 %v808, 1.442695
          %v850 = vpow.pop %v849
          %v851 = vmul.f32 %v809, 1.442695
          %v852 = vpow.pop %v851
          %v853 = vmul.f32 %v810, 1.442695
          %v854 = vpow.pop %v853
          %v855 = vmul.f32 %v811, 1.442695
          %v856 = vpow.pop %v855
          %v857 = vmul.f32 %v812, 1.442695
          %v858 = vpow.pop %v857
          %v859 = vmul.f32 %v813, 1.442695
          %v860 = vpow.pop %v859
          %v861 = vmul.f32 %v814, 1.442695
          %v862 = vpow.pop %v861
          %v863 = vmul.f32 %v815, 1.442695
          %v864 = vpow.pop %v863
          %v865 = vmul.f32 %v816, 1.442695
          %v866 = vpow.pop %v865
          %v867 = vmul.f32 %v817, 1.442695
          %v868 = vpow.pop %v867
          %v869 = vmul.f32 %v818, 1.442695
          %v870 = vpow.pop %v869
          %v871 = vmul.f32 %v819, 1.442695
          %v872 = vpow.pop %v871
          %v873 = vmul.f32 %v820, 1.442695
          %v874 = vpow.pop %v873
          %v875 = vmul.f32 %v821, 1.442695
          %v876 = vpow.pop %v875
          %v877 = vmul.f32 %v822, 1.442695
          %v878 = vpow.pop %v877
          %v879 = vmul.f32 %v823, 1.442695
          %v880 = vpow.pop %v879
          %v881 = vmul.f32 %v824, 1.442695
          %v882 = vpow.pop %v881
          %v883 = vmul.f32 %v825, 1.442695
          %v884 = vpow.pop %v883
          %v885 = vmul.f32 %v826, 1.442695
          %v886 = vpow.pop %v885
          %v887 = vmul.f32 %v827, 1.442695
          %v888 = vpow.pop %v887
          %v889 = vmul.f32 %v828, 1.442695
          %v890 = vpow.pop %v889
          %v891 = vmul.f32 %v829, 1.442695
          %v892 = vpow.pop %v891
          %v893 = vmul.f32 %v830, 1.442695
          %v894 = vpow.pop %v893
          %v895 = vadd.f32 %v832, 1.0
          %v896 = vadd.f32 %v834, 1.0
          %v897 = vadd.f32 %v836, 1.0
          %v898 = vadd.f32 %v838, 1.0
          %v899 = vadd.f32 %v840, 1.0
          %v900 = vadd.f32 %v842, 1.0
          %v901 = vadd.f32 %v844, 1.0
          %v902 = vadd.f32 %v846, 1.0
          %v903 = vadd.f32 %v848, 1.0
          %v904 = vadd.f32 %v850, 1.0
          %v905 = vadd.f32 %v852, 1.0
          %v906 = vadd.f32 %v854, 1.0
          %v907 = vadd.f32 %v856, 1.0
          %v908 = vadd.f32 %v858, 1.0
          %v909 = vadd.f32 %v860, 1.0
          %v910 = vadd.f32 %v862, 1.0
          %v911 = vadd.f32 %v864, 1.0
          %v912 = vadd.f32 %v866, 1.0
          %v913 = vadd.f32 %v868, 1.0
          %v914 = vadd.f32 %v870, 1.0
          %v915 = vadd.f32 %v872, 1.0
          %v916 = vadd.f32 %v874, 1.0
          %v917 = vadd.f32 %v876, 1.0
          %v918 = vadd.f32 %v878, 1.0
          %v919 = vadd.f32 %v880, 1.0
          %v920 = vadd.f32 %v882, 1.0
          %v921 = vadd.f32 %v884, 1.0
          %v922 = vadd.f32 %v886, 1.0
          %v923 = vadd.f32 %v888, 1.0
          %v924 = vadd.f32 %v890, 1.0
          %v925 = vadd.f32 %v892, 1.0
          %v926 = vadd.f32 %v894, 1.0
          %v927 = vrcp.pop %v895
          %v928 = vmul.f32 %v895, %v927
          %v929 = vsub.f32 1.0, %v928
          %v930 = vmul.f32 %v927, %v929
          %v931 = vadd.f32 %v927, %v930
          %vm932 = vweird.f32 %v895
          %vm933 = vweird.f32 %v927
          %vm934 = vmor %vm932, %vm933
          %v935 = vsel %vm934, %v927, %v931
          %v936 = vand.u32 2147483647, %v895
          %vm937 = vcmp.eq.f32.partialorder %v936, 8.507059e+37
          %v938 = vand.u32 %v895, 2147483648
          %v939 = vor.u32 1.1754944e-38, %v938
          %v940 = vsel %vm937, %v939, %v935
          %v941 = vmul.f32 1.0, %v940
          %v942 = vrcp.pop %v896
          %v943 = vmul.f32 %v896, %v942
          %v944 = vsub.f32 1.0, %v943
          %v945 = vmul.f32 %v942, %v944
          %v946 = vadd.f32 %v942, %v945
          %vm947 = vweird.f32 %v896
          %vm948 = vweird.f32 %v942
          %vm949 = vmor %vm947, %vm948
          %v950 = vsel %vm949, %v942, %v946
          %v951 = vand.u32 2147483647, %v896
          %vm952 = vcmp.eq.f32.partialorder %v951, 8.507059e+37
          %v953 = vand.u32 %v896, 2147483648
          %v954 = vor.u32 1.1754944e-38, %v953
          %v955 = vsel %vm952, %v954, %v950
          %v956 = vmul.f32 1.0, %v955
          %v957 = vrcp.pop %v897
          %v958 = vmul.f32 %v897, %v957
          %v959 = vsub.f32 1.0, %v958
          %v960 = vmul.f32 %v957, %v959
          %v961 = vadd.f32 %v957, %v960
          %vm962 = vweird.f32 %v897
          %vm963 = vweird.f32 %v957
          %vm964 = vmor %vm962, %vm963
          %v965 = vsel %vm964, %v957, %v961
          %v966 = vand.u32 2147483647, %v897
          %vm967 = vcmp.eq.f32.partialorder %v966, 8.507059e+37
          %v968 = vand.u32 %v897, 2147483648
          %v969 = vor.u32 1.1754944e-38, %v968
          %v970 = vsel %vm967, %v969, %v965
          %v971 = vmul.f32 1.0, %v970
          %v972 = vrcp.pop %v898
          %v973 = vmul.f32 %v898, %v972
          %v974 = vsub.f32 1.0, %v973
          %v975 = vmul.f32 %v972, %v974
          %v976 = vadd.f32 %v972, %v975
          %vm977 = vweird.f32 %v898
          %vm978 = vweird.f32 %v972
          %vm979 = vmor %vm977, %vm978
          %v980 = vsel %vm979, %v972, %v976
          %v981 = vand.u32 2147483647, %v898
          %vm982 = vcmp.eq.f32.partialorder %v981, 8.507059e+37
          %v983 = vand.u32 %v898, 2147483648
          %v984 = vor.u32 1.1754944e-38, %v983
          %v985 = vsel %vm982, %v984, %v980
          %v986 = vmul.f32 1.0, %v985
          %v987 = vrcp.pop %v899
          %v988 = vmul.f32 %v899, %v987
          %v989 = vsub.f32 1.0, %v988
          %v990 = vmul.f32 %v987, %v989
          %v991 = vadd.f32 %v987, %v990
          %vm992 = vweird.f32 %v899
          %vm993 = vweird.f32 %v987
          %vm994 = vmor %vm992, %vm993
          %v995 = vsel %vm994, %v987, %v991
          %v996 = vand.u32 2147483647, %v899
          %vm997 = vcmp.eq.f32.partialorder %v996, 8.507059e+37
          %v998 = vand.u32 %v899, 2147483648
          %v999 = vor.u32 1.1754944e-38, %v998
          %v1000 = vsel %vm997, %v999, %v995
          %v1001 = vmul.f32 1.0, %v1000
          %v1002 = vrcp.pop %v900
          %v1003 = vmul.f32 %v900, %v1002
          %v1004 = vsub.f32 1.0, %v1003
          %v1005 = vmul.f32 %v1002, %v1004
          %v1006 = vadd.f32 %v1002, %v1005
          %vm1007 = vweird.f32 %v900
          %vm1008 = vweird.f32 %v1002
          %vm1009 = vmor %vm1007, %vm1008
          %v1010 = vsel %vm1009, %v1002, %v1006
          %v1011 = vand.u32 2147483647, %v900
          %vm1012 = vcmp.eq.f32.partialorder %v1011, 8.507059e+37
          %v1013 = vand.u32 %v900, 2147483648
          %v1014 = vor.u32 1.1754944e-38, %v1013
          %v1015 = vsel %vm1012, %v1014, %v1010
          %v1016 = vmul.f32 1.0, %v1015
          %v1017 = vrcp.pop %v901
          %v1018 = vmul.f32 %v901, %v1017
          %v1019 = vsub.f32 1.0, %v1018
          %v1020 = vmul.f32 %v1017, %v1019
          %v1021 = vadd.f32 %v1017, %v1020
          %vm1022 = vweird.f32 %v901
          %vm1023 = vweird.f32 %v1017
          %vm1024 = vmor %vm1022, %vm1023
          %v1025 = vsel %vm1024, %v1017, %v1021
          %v1026 = vand.u32 2147483647, %v901
          %vm1027 = vcmp.eq.f32.partialorder %v1026, 8.507059e+37
          %v1028 = vand.u32 %v901, 2147483648
          %v1029 = vor.u32 1.1754944e-38, %v1028
          %v1030 = vsel %vm1027, %v1029, %v1025
          %v1031 = vmul.f32 1.0, %v1030
          %v1032 = vrcp.pop %v902
          %v1033 = vmul.f32 %v902, %v1032
          %v1034 = vsub.f32 1.0, %v1033
          %v1035 = vmul.f32 %v1032, %v1034
          %v1036 = vadd.f32 %v1032, %v1035
          %vm1037 = vweird.f32 %v902
          %vm1038 = vweird.f32 %v1032
          %vm1039 = vmor %vm1037, %vm1038
          %v1040 = vsel %vm1039, %v1032, %v1036
          %v1041 = vand.u32 2147483647, %v902
          %vm1042 = vcmp.eq.f32.partialorder %v1041, 8.507059e+37
          %v1043 = vand.u32 %v902, 2147483648
          %v1044 = vor.u32 1.1754944e-38, %v1043
          %v1045 = vsel %vm1042, %v1044, %v1040
          %v1046 = vmul.f32 1.0, %v1045
          %v1047 = vrcp.pop %v903
          %v1048 = vmul.f32 %v903, %v1047
          %v1049 = vsub.f32 1.0, %v1048
          %v1050 = vmul.f32 %v1047, %v1049
          %v1051 = vadd.f32 %v1047, %v1050
          %vm1052 = vweird.f32 %v903
          %vm1053 = vweird.f32 %v1047
          %vm1054 = vmor %vm1052, %vm1053
          %v1055 = vsel %vm1054, %v1047, %v1051
          %v1056 = vand.u32 2147483647, %v903
          %vm1057 = vcmp.eq.f32.partialorder %v1056, 8.507059e+37
          %v1058 = vand.u32 %v903, 2147483648
          %v1059 = vor.u32 1.1754944e-38, %v1058
          %v1060 = vsel %vm1057, %v1059, %v1055
          %v1061 = vmul.f32 1.0, %v1060
          %v1062 = vrcp.pop %v904
          %v1063 = vmul.f32 %v904, %v1062
          %v1064 = vsub.f32 1.0, %v1063
          %v1065 = vmul.f32 %v1062, %v1064
          %v1066 = vadd.f32 %v1062, %v1065
          %vm1067 = vweird.f32 %v904
          %vm1068 = vweird.f32 %v1062
          %vm1069 = vmor %vm1067, %vm1068
          %v1070 = vsel %vm1069, %v1062, %v1066
          %v1071 = vand.u32 2147483647, %v904
          %vm1072 = vcmp.eq.f32.partialorder %v1071, 8.507059e+37
          %v1073 = vand.u32 %v904, 2147483648
          %v1074 = vor.u32 1.1754944e-38, %v1073
          %v1075 = vsel %vm1072, %v1074, %v1070
          %v1076 = vmul.f32 1.0, %v1075
          %v1077 = vrcp.pop %v905
          %v1078 = vmul.f32 %v905, %v1077
          %v1079 = vsub.f32 1.0, %v1078
          %v1080 = vmul.f32 %v1077, %v1079
          %v1081 = vadd.f32 %v1077, %v1080
          %vm1082 = vweird.f32 %v905
          %vm1083 = vweird.f32 %v1077
          %vm1084 = vmor %vm1082, %vm1083
          %v1085 = vsel %vm1084, %v1077, %v1081
          %v1086 = vand.u32 2147483647, %v905
          %vm1087 = vcmp.eq.f32.partialorder %v1086, 8.507059e+37
          %v1088 = vand.u32 %v905, 2147483648
          %v1089 = vor.u32 1.1754944e-38, %v1088
          %v1090 = vsel %vm1087, %v1089, %v1085
          %v1091 = vmul.f32 1.0, %v1090
          %v1092 = vrcp.pop %v906
          %v1093 = vmul.f32 %v906, %v1092
          %v1094 = vsub.f32 1.0, %v1093
          %v1095 = vmul.f32 %v1092, %v1094
          %v1096 = vadd.f32 %v1092, %v1095
          %vm1097 = vweird.f32 %v906
          %vm1098 = vweird.f32 %v1092
          %vm1099 = vmor %vm1097, %vm1098
          %v1100 = vsel %vm1099, %v1092, %v1096
          %v1101 = vand.u32 2147483647, %v906
          %vm1102 = vcmp.eq.f32.partialorder %v1101, 8.507059e+37
          %v1103 = vand.u32 %v906, 2147483648
          %v1104 = vor.u32 1.1754944e-38, %v1103
          %v1105 = vsel %vm1102, %v1104, %v1100
          %v1106 = vmul.f32 1.0, %v1105
          %v1107 = vrcp.pop %v907
          %v1108 = vmul.f32 %v907, %v1107
          %v1109 = vsub.f32 1.0, %v1108
          %v1110 = vmul.f32 %v1107, %v1109
          %v1111 = vadd.f32 %v1107, %v1110
          %vm1112 = vweird.f32 %v907
          %vm1113 = vweird.f32 %v1107
          %vm1114 = vmor %vm1112, %vm1113
          %v1115 = vsel %vm1114, %v1107, %v1111
          %v1116 = vand.u32 2147483647, %v907
          %vm1117 = vcmp.eq.f32.partialorder %v1116, 8.507059e+37
          %v1118 = vand.u32 %v907, 2147483648
          %v1119 = vor.u32 1.1754944e-38, %v1118
          %v1120 = vsel %vm1117, %v1119, %v1115
          %v1121 = vmul.f32 1.0, %v1120
          %v1122 = vrcp.pop %v908
          %v1123 = vmul.f32 %v908, %v1122
          %v1124 = vsub.f32 1.0, %v1123
          %v1125 = vmul.f32 %v1122, %v1124
          %v1126 = vadd.f32 %v1122, %v1125
          %vm1127 = vweird.f32 %v908
          %vm1128 = vweird.f32 %v1122
          %vm1129 = vmor %vm1127, %vm1128
          %v1130 = vsel %vm1129, %v1122, %v1126
          %v1131 = vand.u32 2147483647, %v908
          %vm1132 = vcmp.eq.f32.partialorder %v1131, 8.507059e+37
          %v1133 = vand.u32 %v908, 2147483648
          %v1134 = vor.u32 1.1754944e-38, %v1133
          %v1135 = vsel %vm1132, %v1134, %v1130
          %v1136 = vmul.f32 1.0, %v1135
          %v1137 = vrcp.pop %v909
          %v1138 = vmul.f32 %v909, %v1137
          %v1139 = vsub.f32 1.0, %v1138
          %v1140 = vmul.f32 %v1137, %v1139
          %v1141 = vadd.f32 %v1137, %v1140
          %vm1142 = vweird.f32 %v909
          %vm1143 = vweird.f32 %v1137
          %vm1144 = vmor %vm1142, %vm1143
          %v1145 = vsel %vm1144, %v1137, %v1141
          %v1146 = vand.u32 2147483647, %v909
          %vm1147 = vcmp.eq.f32.partialorder %v1146, 8.507059e+37
          %v1148 = vand.u32 %v909, 2147483648
          %v1149 = vor.u32 1.1754944e-38, %v1148
          %v1150 = vsel %vm1147, %v1149, %v1145
          %v1151 = vmul.f32 1.0, %v1150
          %v1152 = vrcp.pop %v910
          %v1153 = vmul.f32 %v910, %v1152
          %v1154 = vsub.f32 1.0, %v1153
          %v1155 = vmul.f32 %v1152, %v1154
          %v1156 = vadd.f32 %v1152, %v1155
          %vm1157 = vweird.f32 %v910
          %vm1158 = vweird.f32 %v1152
          %vm1159 = vmor %vm1157, %vm1158
          %v1160 = vsel %vm1159, %v1152, %v1156
          %v1161 = vand.u32 2147483647, %v910
          %vm1162 = vcmp.eq.f32.partialorder %v1161, 8.507059e+37
          %v1163 = vand.u32 %v910, 2147483648
          %v1164 = vor.u32 1.1754944e-38, %v1163
          %v1165 = vsel %vm1162, %v1164, %v1160
          %v1166 = vmul.f32 1.0, %v1165
          %v1167 = vrcp.pop %v911
          %v1168 = vmul.f32 %v911, %v1167
          %v1169 = vsub.f32 1.0, %v1168
          %v1170 = vmul.f32 %v1167, %v1169
          %v1171 = vadd.f32 %v1167, %v1170
          %vm1172 = vweird.f32 %v911
          %vm1173 = vweird.f32 %v1167
          %vm1174 = vmor %vm1172, %vm1173
          %v1175 = vsel %vm1174, %v1167, %v1171
          %v1176 = vand.u32 2147483647, %v911
          %vm1177 = vcmp.eq.f32.partialorder %v1176, 8.507059e+37
          %v1178 = vand.u32 %v911, 2147483648
          %v1179 = vor.u32 1.1754944e-38, %v1178
          %v1180 = vsel %vm1177, %v1179, %v1175
          %v1181 = vmul.f32 1.0, %v1180
          %v1182 = vrcp.pop %v912
          %v1183 = vmul.f32 %v912, %v1182
          %v1184 = vsub.f32 1.0, %v1183
          %v1185 = vmul.f32 %v1182, %v1184
          %v1186 = vadd.f32 %v1182, %v1185
          %vm1187 = vweird.f32 %v912
          %vm1188 = vweird.f32 %v1182
          %vm1189 = vmor %vm1187, %vm1188
          %v1190 = vsel %vm1189, %v1182, %v1186
          %v1191 = vand.u32 2147483647, %v912
          %vm1192 = vcmp.eq.f32.partialorder %v1191, 8.507059e+37
          %v1193 = vand.u32 %v912, 2147483648
          %v1194 = vor.u32 1.1754944e-38, %v1193
          %v1195 = vsel %vm1192, %v1194, %v1190
          %v1196 = vmul.f32 1.0, %v1195
          %v1197 = vrcp.pop %v913
          %v1198 = vmul.f32 %v913, %v1197
          %v1199 = vsub.f32 1.0, %v1198
          %v1200 = vmul.f32 %v1197, %v1199
          %v1201 = vadd.f32 %v1197, %v1200
          %vm1202 = vweird.f32 %v913
          %vm1203 = vweird.f32 %v1197
          %vm1204 = vmor %vm1202, %vm1203
          %v1205 = vsel %vm1204, %v1197, %v1201
          %v1206 = vand.u32 2147483647, %v913
          %vm1207 = vcmp.eq.f32.partialorder %v1206, 8.507059e+37
          %v1208 = vand.u32 %v913, 2147483648
          %v1209 = vor.u32 1.1754944e-38, %v1208
          %v1210 = vsel %vm1207, %v1209, %v1205
          %v1211 = vmul.f32 1.0, %v1210
          %v1212 = vrcp.pop %v914
          %v1213 = vmul.f32 %v914, %v1212
          %v1214 = vsub.f32 1.0, %v1213
          %v1215 = vmul.f32 %v1212, %v1214
          %v1216 = vadd.f32 %v1212, %v1215
          %vm1217 = vweird.f32 %v914
          %vm1218 = vweird.f32 %v1212
          %vm1219 = vmor %vm1217, %vm1218
          %v1220 = vsel %vm1219, %v1212, %v1216
          %v1221 = vand.u32 2147483647, %v914
          %vm1222 = vcmp.eq.f32.partialorder %v1221, 8.507059e+37
          %v1223 = vand.u32 %v914, 2147483648
          %v1224 = vor.u32 1.1754944e-38, %v1223
          %v1225 = vsel %vm1222, %v1224, %v1220
          %v1226 = vmul.f32 1.0, %v1225
          %v1227 = vrcp.pop %v915
          %v1228 = vmul.f32 %v915, %v1227
          %v1229 = vsub.f32 1.0, %v1228
          %v1230 = vmul.f32 %v1227, %v1229
          %v1231 = vadd.f32 %v1227, %v1230
          %vm1232 = vweird.f32 %v915
          %vm1233 = vweird.f32 %v1227
          %vm1234 = vmor %vm1232, %vm1233
          %v1235 = vsel %vm1234, %v1227, %v1231
          %v1236 = vand.u32 2147483647, %v915
          %vm1237 = vcmp.eq.f32.partialorder %v1236, 8.507059e+37
          %v1238 = vand.u32 %v915, 2147483648
          %v1239 = vor.u32 1.1754944e-38, %v1238
          %v1240 = vsel %vm1237, %v1239, %v1235
          %v1241 = vmul.f32 1.0, %v1240
          %v1242 = vrcp.pop %v916
          %v1243 = vmul.f32 %v916, %v1242
          %v1244 = vsub.f32 1.0, %v1243
          %v1245 = vmul.f32 %v1242, %v1244
          %v1246 = vadd.f32 %v1242, %v1245
          %vm1247 = vweird.f32 %v916
          %vm1248 = vweird.f32 %v1242
          %vm1249 = vmor %vm1247, %vm1248
          %v1250 = vsel %vm1249, %v1242, %v1246
          %v1251 = vand.u32 2147483647, %v916
          %vm1252 = vcmp.eq.f32.partialorder %v1251, 8.507059e+37
          %v1253 = vand.u32 %v916, 2147483648
          %v1254 = vor.u32 1.1754944e-38, %v1253
          %v1255 = vsel %vm1252, %v1254, %v1250
          %v1256 = vmul.f32 1.0, %v1255
          %v1257 = vrcp.pop %v917
          %v1258 = vmul.f32 %v917, %v1257
          %v1259 = vsub.f32 1.0, %v1258
          %v1260 = vmul.f32 %v1257, %v1259
          %v1261 = vadd.f32 %v1257, %v1260
          %vm1262 = vweird.f32 %v917
          %vm1263 = vweird.f32 %v1257
          %vm1264 = vmor %vm1262, %vm1263
          %v1265 = vsel %vm1264, %v1257, %v1261
          %v1266 = vand.u32 2147483647, %v917
          %vm1267 = vcmp.eq.f32.partialorder %v1266, 8.507059e+37
          %v1268 = vand.u32 %v917, 2147483648
          %v1269 = vor.u32 1.1754944e-38, %v1268
          %v1270 = vsel %vm1267, %v1269, %v1265
          %v1271 = vmul.f32 1.0, %v1270
          %v1272 = vrcp.pop %v918
          %v1273 = vmul.f32 %v918, %v1272
          %v1274 = vsub.f32 1.0, %v1273
          %v1275 = vmul.f32 %v1272, %v1274
          %v1276 = vadd.f32 %v1272, %v1275
          %vm1277 = vweird.f32 %v918
          %vm1278 = vweird.f32 %v1272
          %vm1279 = vmor %vm1277, %vm1278
          %v1280 = vsel %vm1279, %v1272, %v1276
          %v1281 = vand.u32 2147483647, %v918
          %vm1282 = vcmp.eq.f32.partialorder %v1281, 8.507059e+37
          %v1283 = vand.u32 %v918, 2147483648
          %v1284 = vor.u32 1.1754944e-38, %v1283
          %v1285 = vsel %vm1282, %v1284, %v1280
          %v1286 = vmul.f32 1.0, %v1285
          %v1287 = vrcp.pop %v919
          %v1288 = vmul.f32 %v919, %v1287
          %v1289 = vsub.f32 1.0, %v1288
          %v1290 = vmul.f32 %v1287, %v1289
          %v1291 = vadd.f32 %v1287, %v1290
          %vm1292 = vweird.f32 %v919
          %vm1293 = vweird.f32 %v1287
          %vm1294 = vmor %vm1292, %vm1293
          %v1295 = vsel %vm1294, %v1287, %v1291
          %v1296 = vand.u32 2147483647, %v919
          %vm1297 = vcmp.eq.f32.partialorder %v1296, 8.507059e+37
          %v1298 = vand.u32 %v919, 2147483648
          %v1299 = vor.u32 1.1754944e-38, %v1298
          %v1300 = vsel %vm1297, %v1299, %v1295
          %v1301 = vmul.f32 1.0, %v1300
          %v1302 = vrcp.pop %v920
          %v1303 = vmul.f32 %v920, %v1302
          %v1304 = vsub.f32 1.0, %v1303
          %v1305 = vmul.f32 %v1302, %v1304
          %v1306 = vadd.f32 %v1302, %v1305
          %vm1307 = vweird.f32 %v920
          %vm1308 = vweird.f32 %v1302
          %vm1309 = vmor %vm1307, %vm1308
          %v1310 = vsel %vm1309, %v1302, %v1306
          %v1311 = vand.u32 2147483647, %v920
          %vm1312 = vcmp.eq.f32.partialorder %v1311, 8.507059e+37
          %v1313 = vand.u32 %v920, 2147483648
          %v1314 = vor.u32 1.1754944e-38, %v1313
          %v1315 = vsel %vm1312, %v1314, %v1310
          %v1316 = vmul.f32 1.0, %v1315
          %v1317 = vrcp.pop %v921
          %v1318 = vmul.f32 %v921, %v1317
          %v1319 = vsub.f32 1.0, %v1318
          %v1320 = vmul.f32 %v1317, %v1319
          %v1321 = vadd.f32 %v1317, %v1320
          %vm1322 = vweird.f32 %v921
          %vm1323 = vweird.f32 %v1317
          %vm1324 = vmor %vm1322, %vm1323
          %v1325 = vsel %vm1324, %v1317, %v1321
          %v1326 = vand.u32 2147483647, %v921
          %vm1327 = vcmp.eq.f32.partialorder %v1326, 8.507059e+37
          %v1328 = vand.u32 %v921, 2147483648
          %v1329 = vor.u32 1.1754944e-38, %v1328
          %v1330 = vsel %vm1327, %v1329, %v1325
          %v1331 = vmul.f32 1.0, %v1330
          %v1332 = vrcp.pop %v922
          %v1333 = vmul.f32 %v922, %v1332
          %v1334 = vsub.f32 1.0, %v1333
          %v1335 = vmul.f32 %v1332, %v1334
          %v1336 = vadd.f32 %v1332, %v1335
          %vm1337 = vweird.f32 %v922
          %vm1338 = vweird.f32 %v1332
          %vm1339 = vmor %vm1337, %vm1338
          %v1340 = vsel %vm1339, %v1332, %v1336
          %v1341 = vand.u32 2147483647, %v922
          %vm1342 = vcmp.eq.f32.partialorder %v1341, 8.507059e+37
          %v1343 = vand.u32 %v922, 2147483648
          %v1344 = vor.u32 1.1754944e-38, %v1343
          %v1345 = vsel %vm1342, %v1344, %v1340
          %v1346 = vmul.f32 1.0, %v1345
          %v1347 = vrcp.pop %v923
          %v1348 = vmul.f32 %v923, %v1347
          %v1349 = vsub.f32 1.0, %v1348
          %v1350 = vmul.f32 %v1347, %v1349
          %v1351 = vadd.f32 %v1347, %v1350
          %vm1352 = vweird.f32 %v923
          %vm1353 = vweird.f32 %v1347
          %vm1354 = vmor %vm1352, %vm1353
          %v1355 = vsel %vm1354, %v1347, %v1351
          %v1356 = vand.u32 2147483647, %v923
          %vm1357 = vcmp.eq.f32.partialorder %v1356, 8.507059e+37
          %v1358 = vand.u32 %v923, 2147483648
          %v1359 = vor.u32 1.1754944e-38, %v1358
          %v1360 = vsel %vm1357, %v1359, %v1355
          %v1361 = vmul.f32 1.0, %v1360
          %v1362 = vrcp.pop %v924
          %v1363 = vmul.f32 %v924, %v1362
          %v1364 = vsub.f32 1.0, %v1363
          %v1365 = vmul.f32 %v1362, %v1364
          %v1366 = vadd.f32 %v1362, %v1365
          %vm1367 = vweird.f32 %v924
          %vm1368 = vweird.f32 %v1362
          %vm1369 = vmor %vm1367, %vm1368
          %v1370 = vsel %vm1369, %v1362, %v1366
          %v1371 = vand.u32 2147483647, %v924
          %vm1372 = vcmp.eq.f32.partialorder %v1371, 8.507059e+37
          %v1373 = vand.u32 %v924, 2147483648
          %v1374 = vor.u32 1.1754944e-38, %v1373
          %v1375 = vsel %vm1372, %v1374, %v1370
          %v1376 = vmul.f32 1.0, %v1375
          %v1377 = vrcp.pop %v925
          %v1378 = vmul.f32 %v925, %v1377
          %v1379 = vsub.f32 1.0, %v1378
          %v1380 = vmul.f32 %v1377, %v1379
          %v1381 = vadd.f32 %v1377, %v1380
          %vm1382 = vweird.f32 %v925
          %vm1383 = vweird.f32 %v1377
          %vm1384 = vmor %vm1382, %vm1383
          %v1385 = vsel %vm1384, %v1377, %v1381
          %v1386 = vand.u32 2147483647, %v925
          %vm1387 = vcmp.eq.f32.partialorder %v1386, 8.507059e+37
          %v1388 = vand.u32 %v925, 2147483648
          %v1389 = vor.u32 1.1754944e-38, %v1388
          %v1390 = vsel %vm1387, %v1389, %v1385
          %v1391 = vmul.f32 1.0, %v1390
          %v1392 = vrcp.pop %v926
          %v1393 = vmul.f32 %v926, %v1392
          %v1394 = vsub.f32 1.0, %v1393
          %v1395 = vmul.f32 %v1392, %v1394
          %v1396 = vadd.f32 %v1392, %v1395
          %vm1397 = vweird.f32 %v926
          %vm1398 = vweird.f32 %v1392
          %vm1399 = vmor %vm1397, %vm1398
          %v1400 = vsel %vm1399, %v1392, %v1396
          %v1401 = vand.u32 2147483647, %v926
          %vm1402 = vcmp.eq.f32.partialorder %v1401, 8.507059e+37
          %v1403 = vand.u32 %v926, 2147483648
          %v1404 = vor.u32 1.1754944e-38, %v1403
          %v1405 = vsel %vm1402, %v1404, %v1400
          %v1406 = vmul.f32 1.0, %v1405
          %v1407 = vmul.f32 %v767, %v941
          %v1408 = vmul.f32 %v768, %v956
          %v1409 = vmul.f32 %v769, %v971
          %v1410 = vmul.f32 %v770, %v986
          %v1411 = vmul.f32 %v771, %v1001
          %v1412 = vmul.f32 %v772, %v1016
          %v1413 = vmul.f32 %v773, %v1031
          %v1414 = vmul.f32 %v774, %v1046
          %v1415 = vmul.f32 %v775, %v1061
          %v1416 = vmul.f32 %v776, %v1076
          %v1417 = vmul.f32 %v777, %v1091
          %v1418 = vmul.f32 %v778, %v1106
          %v1419 = vmul.f32 %v779, %v1121
          %v1420 = vmul.f32 %v780, %v1136
          %v1421 = vmul.f32 %v781, %v1151
          %v1422 = vmul.f32 %v782, %v1166
          %v1423 = vmul.f32 %v783, %v1181
          %v1424 = vmul.f32 %v784, %v1196
          %v1425 = vmul.f32 %v785, %v1211
          %v1426 = vmul.f32 %v786, %v1226
          %v1427 = vmul.f32 %v787, %v1241
          %v1428 = vmul.f32 %v788, %v1256
          %v1429 = vmul.f32 %v789, %v1271
          %v1430 = vmul.f32 %v790, %v1286
          %v1431 = vmul.f32 %v791, %v1301
          %v1432 = vmul.f32 %v792, %v1316
          %v1433 = vmul.f32 %v793, %v1331
          %v1434 = vmul.f32 %v794, %v1346
          %v1435 = vmul.f32 %v795, %v1361
          %v1436 = vmul.f32 %v796, %v1376
          %v1437 = vmul.f32 %v797, %v1391
          %v1438 = vmul.f32 %v798, %v1406
          %1439 = vst [vmem:[%s215] sm:$0xff] %v1407
          %1440 = vst [vmem:[%s215 + $0x8] sm:$0xff] %v1408
          %1441 = vst [vmem:[%s215 + $0x10] sm:$0xff] %v1409
          %1442 = vst [vmem:[%s215 + $0x18] sm:$0xff] %v1410
          %1443 = vst [vmem:[%s215 + $0x20] sm:$0xff] %v1411
          %1444 = vst [vmem:[%s215 + $0x28] sm:$0xff] %v1412
          %1445 = vst [vmem:[%s215 + $0x30] sm:$0xff] %v1413
          %1446 = vst [vmem:[%s215 + $0x38] sm:$0xff] %v1414
          %1447 = vst [vmem:[%s215 + $0x40] sm:$0xff] %v1415
          %1448 = vst [vmem:[%s215 + $0x48] sm:$0xff] %v1416
          %1449 = vst [vmem:[%s215 + $0x50] sm:$0xff] %v1417
          %1450 = vst [vmem:[%s215 + $0x58] sm:$0xff] %v1418
          %1451 = vst [vmem:[%s215 + $0x60] sm:$0xff] %v1419
          %1452 = vst [vmem:[%s215 + $0x68] sm:$0xff] %v1420
          %1453 = vst [vmem:[%s215 + $0x70] sm:$0xff] %v1421
          %1454 = vst [vmem:[%s215 + $0x78] sm:$0xff] %v1422
          %1455 = vst [vmem:[%s215 + $0x80] sm:$0xff] %v1423
          %1456 = vst [vmem:[%s215 + $0x88] sm:$0xff] %v1424
          %1457 = vst [vmem:[%s215 + $0x90] sm:$0xff] %v1425
          %1458 = vst [vmem:[%s215 + $0x98] sm:$0xff] %v1426
          %1459 = vst [vmem:[%s215 + $0xa0] sm:$0xff] %v1427
          %1460 = vst [vmem:[%s215 + $0xa8] sm:$0xff] %v1428
          %1461 = vst [vmem:[%s215 + $0xb0] sm:$0xff] %v1429
          %1462 = vst [vmem:[%s215 + $0xb8] sm:$0xff] %v1430
          %1463 = vst [vmem:[%s215 + $0xc0] sm:$0xff] %v1431
          %1464 = vst [vmem:[%s215 + $0xc8] sm:$0xff] %v1432
          %1465 = vst [vmem:[%s215 + $0xd0] sm:$0xff] %v1433
          %1466 = vst [vmem:[%s215 + $0xd8] sm:$0xff] %v1434
          %1467 = vst [vmem:[%s215 + $0xe0] sm:$0xff] %v1435
          %1468 = vst [vmem:[%s215 + $0xe8] sm:$0xff] %v1436
          %1469 = vst [vmem:[%s215 + $0xf0] sm:$0xff] %v1437
          %1470 = vst [vmem:[%s215 + $0xf8] sm:$0xff] %v1438
        $region52: #{tpu_custom_call.1} parent=35 // pred_fallthru
          _
        %s1471 = sand.u32 %s133, 1
        %s1472 = scalar_lea.sflag [#allocation8], %s1471
        %s1473 = sand.u32 %s133, 1
        %s1474 = smul.addr %s1473, 256
        %s1475 = scalar_lea.vmem [#allocation7], %s1474
        // Predicated region
        $region53: #{tpu_custom_call.1} parent=35 // pred_check
          %p1476 = pneg %p143
        $region54: #{tpu_custom_call.1} parent=35 // pred_check_branch
          %1478 = sbr.rel (%p1476) target = $region56
        $region55: #{tpu_custom_call.1} parent=35 // pred_region
          %s1479 = smul.u32 %s22, %s23
          %s1480 = smul.u32 32, %s1479
          %1482 = vsyncadd %s1472, 0
          %s1483 = smul.addr %s1480, 8
          %s1484 = scalar_lea.hbm %s4, %s1483
          %s1485 = sshll.u32 %s1475, 4
          %s1486 = int_to_ptr.vmem [resolvable:$true] %s1485
          %s1487 = sshll.u32 %s1484, 4
          %s1488 = int_to_ptr.hbm [resolvable:$true] %s1487
          %1493 = dma.vmem_to_hbm [thread:$0]  %s1486, 4096, %s1488, %s1472, 128, 128, 8
        $region56: #{tpu_custom_call.1} parent=35 // pred_fallthru
          _
      $region36: #{tpu_custom_call.1} parent=5 // pred_fallthru
        _
      %p1494 = scmp.le.s32.totalorder 2, %s13
      // Predicated region
      $region57: #{tpu_custom_call.1} parent=5 // pred_check
        %p1495 = pneg %p1494
      $region58: #{tpu_custom_call.1} parent=5 // pred_check_branch
        %1497 = sbr.rel (%p1495) target = $region60
      $region59: #{tpu_custom_call.1} parent=5 // pred_region
        %s1498 = ssub.s32 %s13, 2
        // Predicated region
        $region61: #{tpu_custom_call.1} parent=59 // pred_check
          %p1499 = pneg %p149
        $region62: #{tpu_custom_call.1} parent=59 // pred_check_branch
          %1501 = sbr.rel (%p1499) target = $region64
        $region63: #{tpu_custom_call.1} parent=59 // pred_region
          %s1502 = sand.u32 %s134, 1
          %s1503 = scalar_lea.sflag [#allocation8], %s1502
          %s1504 = sand.u32 %s134, 1
          %s1505 = smul.addr %s1504, 256
          %s1506 = scalar_lea.vmem [#allocation7], %s1505
          %1508 = dma.done %s1503, 4096
        $region64: #{tpu_custom_call.1} parent=59 // pred_fallthru
          _
      $region60: #{tpu_custom_call.1} parent=5 // pred_fallthru
        _
    $region6: #{tpu_custom_call.1} parent=1 // loop_footer
      %s17 = sadd.s32 1, %s13
    $region7: #{tpu_custom_call.1} parent=1 // loop_footer_branch
      %12 = sbr.rel target = $region3
    $region8: #{tpu_custom_call.1} parent=1 // loop_exit
      _
    %1509 = vsyncpa [#allocation8], 1
    %s1510 = scalar_lea.sflag [#allocation8], 1
    %1511 = vsyncpa %s1510, 1

</llo_original>
